<compile_context>
chip_gen: v7x
topology: tpu7x:2x2x1
jax: 0.10.0
libtpu: 0.0.40
codegen_flags: <defaults>
</compile_context>

<pallas_src>
import functools
import math

import jax
import jax.numpy as jnp
from jax.experimental import pallas as pl
from jax.experimental.pallas import tpu as pltpu


def _mha_fused_kernel(x_ref, wqkv_ref, wout_ref, bout_ref, o_ref, *,
                      seq_len, num_heads):
    """Fused QKV projection + causal attention (all heads) + output projection
    for `Bb` batch elements stacked along the row axis of the block."""
    S = seq_len
    H = num_heads
    rows, E = x_ref.shape            # rows = Bb * S
    Bb = rows // S
    HE = H * E

    x = x_ref[...]                   # (rows, E)   bf16
    wqkv = wqkv_ref[...]             # (E, 3*HE)   bf16, layout [Q_all|K_all|V_all],
                                     #             1/sqrt(E) already folded into Q
    w_out = wout_ref[...]            # (HE, n_pad) bf16, zero-padded lanes
    b_out = bout_ref[...]            # (1,  n_pad) f32,  zero-padded lanes

    # One wide QKV projection for every head and every row of this block.
    proj = jnp.dot(x, wqkv, preferred_element_type=jnp.float32)   # (rows, 3*HE) f32

    # Additive causal bias computed once, shared by all (batch, head) pairs.
    r = jax.lax.broadcasted_iota(jnp.int32, (S, S), 0)
    c = jax.lax.broadcasted_iota(jnp.int32, (S, S), 1)
    bias = jnp.where(r >= c, jnp.float32(0.0), jnp.float32(-1e30))  # (S, S)

    for b in range(Bb):              # Bb and H are tiny & static -> trace-time unroll
        heads = []
        for h in range(H):
            q = proj[b * S:(b + 1) * S, h * E:(h + 1) * E].astype(jnp.bfloat16)
            k = proj[b * S:(b + 1) * S, HE + h * E:HE + (h + 1) * E].astype(jnp.bfloat16)
            v = proj[b * S:(b + 1) * S, 2 * HE + h * E:2 * HE + (h + 1) * E].astype(jnp.bfloat16)

            # q @ k^T without materializing a transpose; scores already scaled.
            s = jax.lax.dot_general(q, k, (((1,), (1,)), ((), ())),
                                    preferred_element_type=jnp.float32) + bias
            m = jnp.max(s, axis=-1, keepdims=True)
            p = jnp.exp(s - m)
            # TODO(synk): attention dropout_p=0.1 treated as identity (eval mode).
            attn = p / jnp.sum(p, axis=-1, keepdims=True)

            heads.append(jnp.dot(attn.astype(jnp.bfloat16), v,
                                 preferred_element_type=jnp.float32)
                         .astype(jnp.bfloat16))

        # Heads reassembled along lanes -> output projection is ONE K=H*E matmul
        # instead of H separate K=E matmuls.
        cat = jnp.concatenate(heads, axis=-1)                       # (S, HE) bf16
        out_b = jnp.dot(cat, w_out, preferred_element_type=jnp.float32) + b_out
        # TODO(synk): final nn.Dropout(0.1) treated as identity (eval mode).
        o_ref[b * S:(b + 1) * S, :] = out_b.astype(o_ref.dtype)    # lane-dense vst


def _tensorcores_per_chip() -> int:
    """v7x exposes two TensorCores per chip; v5e/v6e expose one."""
    try:
        kind = jax.devices()[0].device_kind.lower()
    except Exception:
        return 1
    return 2 if ("v7" in kind or "7x" in kind) else 1


def multi_head_attention(x, wq, wk, wv, w_out, b_out):
    """x: (B,S,E); wq/wk/wv: (H,E,E) in `x @ W` layout (i.e. transposed PyTorch
    Linear weights); w_out: (H*E,E); b_out: (1,E). Returns (B,S,E) f32."""
    B, S, E = x.shape
    H = wq.shape[0]
    HE = H * E
    n_pad = ((E + 127) // 128) * 128     # lane-dense output width

    # ---- one-time weight prep (wrapper, outside the kernel) ----
    # Stack every head's Q/K/V weights into one (E, 3*H*E) matrix for a single
    # wide projection matmul; fold the softmax scale 1/sqrt(E) into Q so the
    # kernel never multiplies the (S,S) scores.
    scale = 1.0 / math.sqrt(E)           # each head projects to the full E here
    wq_flat = jnp.transpose(wq, (1, 0, 2)).reshape(E, HE) * scale
    wk_flat = jnp.transpose(wk, (1, 0, 2)).reshape(E, HE)
    wv_flat = jnp.transpose(wv, (1, 0, 2)).reshape(E, HE)
    wqkv = jnp.concatenate([wq_flat, wk_flat, wv_flat], axis=-1)

    # Zero-pad the output projection to a multiple of 128 lanes so every result
    # store is an unmasked full-lane vst; the pad is sliced off below.
    w_out_pad = jnp.pad(w_out, ((0, 0), (0, n_pad - E)))
    b_out_pad = jnp.pad(b_out.astype(jnp.float32), ((0, 0), (0, n_pad - E)))

    # bf16 MXU operands; all accumulation stays f32 inside the kernel.
    x2d = x.astype(jnp.bfloat16).reshape(B * S, E)
    wqkv_bf = wqkv.astype(jnp.bfloat16)
    w_out_bf = w_out_pad.astype(jnp.bfloat16)

    # Grid: v7x (2 TCs) keeps a parallel batch axis so both cores work; on
    # single-TC v5e/v6e a (B,) grid is just a serial loop with ~0.35us/step
    # overhead, so collapse to one step and fold the batch into the rows.
    if _tensorcores_per_chip() >= 2 and B >= 2:
        grid, bb = (B,), 1
    else:
        grid, bb = (1,), B

    kernel = functools.partial(_mha_fused_kernel, seq_len=S, num_heads=H)

    # NOTE: per-step working set here is only a few hundred KiB. Before scaling
    # S into the thousands, switch to a flash-style (B, S//tq, S//tk) grid with
    # online-softmax VMEM scratch (kv axis last, "arbitrary") and set
    # vmem_limit_bytes explicitly -- the (S,S) f32 scores alone reach 16 MiB at
    # S=2048, which does not fit v7x's 32 MiB scoped default (64 MiB physical).
    out = pl.pallas_call(
        kernel,
        out_shape=jax.ShapeDtypeStruct((B * S, n_pad), jnp.float32),
        grid=grid,
        in_specs=[
            pl.BlockSpec((bb * S, E), lambda b: (b, 0)),
            pl.BlockSpec((E, 3 * HE), lambda b: (0, 0)),
            pl.BlockSpec((HE, n_pad), lambda b: (0, 0)),
            pl.BlockSpec((1, n_pad), lambda b: (0, 0)),
        ],
        out_specs=pl.BlockSpec((bb * S, n_pad), lambda b: (b, 0)),
        compiler_params=pltpu.CompilerParams(
            dimension_semantics=("parallel",)),
    )(x2d, wqkv_bf, w_out_bf, b_out_pad)

    # Drop the lane padding and restore (B, S, E) -- pure layout plumbing.
    return out[:, :E].reshape(B, S, E)


def _reference(x, wq, wk, wv, w_out, b_out):
    """Pure-JAX f32 reference (dropout in eval mode)."""
    B, S, E = x.shape
    H = wq.shape[0]
    scale = 1.0 / math.sqrt(E)
    causal = jnp.tril(jnp.ones((S, S), dtype=bool))
    heads = []
    for h in range(H):
        q = x @ wq[h]
        k = x @ wk[h]
        v = x @ wv[h]
        s = jnp.einsum("bqe,bke->bqk", q, k) * scale
        s = jnp.where(causal, s, -jnp.inf)
        p = jax.nn.softmax(s, axis=-1)
        heads.append(jnp.einsum("bqk,bke->bqe", p, v))
    cat = jnp.concatenate(heads, axis=-1)
    return cat @ w_out + b_out


if __name__ == "__main__":
    B, S, E, H = 2, 8, 32, 4

    key = jax.random.PRNGKey(0)
    kx, kq, kk, kv, kw, kb = jax.random.split(key, 6)

    # Deterministic synthetic parameters (shapes match the torch module).
    x = jax.random.normal(kx, (B, S, E), dtype=jnp.float32)
    wq = jax.random.normal(kq, (H, E, E), dtype=jnp.float32) * 0.05
    wk = jax.random.normal(kk, (H, E, E), dtype=jnp.float32) * 0.05
    wv = jax.random.normal(kv, (H, E, E), dtype=jnp.float32) * 0.05
    w_out = jax.random.normal(kw, (H * E, E), dtype=jnp.float32) * 0.05
    b_out = jax.random.normal(kb, (1, E), dtype=jnp.float32) * 0.05

    y = multi_head_attention(x, wq, wk, wv, w_out, b_out)
    jax.block_until_ready(y)
    assert y.shape == (B, S, E), y.shape

    y_ref = _reference(x, wq, wk, wv, w_out, b_out)
    assert jnp.allclose(y, y_ref, atol=3e-2, rtol=3e-2), (
        float(jnp.max(jnp.abs(y - y_ref))))

    print("KERNEL_OK")
</pallas_src>

<mosaic_0001>
module attributes {stable_mosaic.version = 11 : i64} {
  func.func @_mha_fused_kernel(%arg0: i32, %arg1: memref<16x32xbf16, #tpu.memory_space<vmem>>, %arg2: memref<32x384xbf16, #tpu.memory_space<vmem>>, %arg3: memref<128x128xbf16, #tpu.memory_space<vmem>>, %arg4: memref<1x128xf32, #tpu.memory_space<vmem>>, %arg5: memref<16x128xf32, #tpu.memory_space<vmem>>) attributes {dimension_semantics = [#tpu.dimension_semantics<parallel>], iteration_bounds = array<i64: 1>, scalar_prefetch = 0 : i64, scratch_operands = 0 : i64, tpu.core_type = #tpu.core_type<tc>, window_params = [{transform_indices = @transform_0, window_bounds = array<i64: 16, 32>}, {pipeline_mode = #tpu.pipeline_mode<synchronous>, transform_indices = @transform_1, window_bounds = array<i64: 32, 384>}, {pipeline_mode = #tpu.pipeline_mode<synchronous>, transform_indices = @transform_2, window_bounds = array<i64: 128, 128>}, {pipeline_mode = #tpu.pipeline_mode<synchronous>, transform_indices = @transform_3, window_bounds = array<i64: 1, 128>}, {transform_indices = @transform_4, window_bounds = array<i64: 16, 128>}]} {
    %c0 = arith.constant 0 : index
    %c0_0 = arith.constant 0 : index
    %0 = vector.load %arg1[%c0, %c0_0] : memref<16x32xbf16, #tpu.memory_space<vmem>>, vector<16x32xbf16>
    %c0_1 = arith.constant 0 : index
    %c0_2 = arith.constant 0 : index
    %1 = vector.load %arg2[%c0_1, %c0_2] : memref<32x384xbf16, #tpu.memory_space<vmem>>, vector<32x384xbf16>
    %c0_3 = arith.constant 0 : index
    %c0_4 = arith.constant 0 : index
    %2 = vector.load %arg3[%c0_3, %c0_4] : memref<128x128xbf16, #tpu.memory_space<vmem>>, vector<128x128xbf16>
    %c0_5 = arith.constant 0 : index
    %c0_6 = arith.constant 0 : index
    %3 = vector.load %arg4[%c0_5, %c0_6] : memref<1x128xf32, #tpu.memory_space<vmem>>, vector<1x128xf32>
    %cst = arith.constant dense<0.000000e+00> : vector<16x384xf32>
    %4 = tpu.matmul %0, %1, %cst {dimension_numbers = #tpu.dot_dimension_numbers<[1], [0], [0], [1], [0, 0, 1, 1], [], []>} : vector<16x32xbf16>, vector<32x384xbf16>, vector<16x384xf32> -> vector<16x384xf32>
    %5 = tpu.iota {dimensions = array<i32: 0>} : vector<8x8xi32>
    %6 = tpu.iota {dimensions = array<i32: 1>} : vector<8x8xi32>
    %7 = arith.cmpi sge, %5, %6 : vector<8x8xi32>
    %cst_7 = arith.constant 0.000000e+00 : f32
    %cst_8 = arith.constant -1.000000e+30 : f32
    %8 = vector.broadcast %cst_7 : f32 to vector<8x8xf32>
    %9 = vector.broadcast %cst_8 : f32 to vector<8x8xf32>
    %10 = arith.select %7, %8, %9 : vector<8x8xi1>, vector<8x8xf32>
    %11 = vector.extract_strided_slice %4 {offsets = [0, 0], sizes = [8, 32], strides = [1, 1]} : vector<16x384xf32> to vector<8x32xf32>
    %12 = arith.truncf %11 : vector<8x32xf32> to vector<8x32xbf16>
    %13 = vector.extract_strided_slice %4 {offsets = [0, 128], sizes = [8, 32], strides = [1, 1]} : vector<16x384xf32> to vector<8x32xf32>
    %14 = arith.truncf %13 : vector<8x32xf32> to vector<8x32xbf16>
    %15 = vector.extract_strided_slice %4 {offsets = [0, 256], sizes = [8, 32], strides = [1, 1]} : vector<16x384xf32> to vector<8x32xf32>
    %16 = arith.truncf %15 : vector<8x32xf32> to vector<8x32xbf16>
    %cst_9 = arith.constant dense<0.000000e+00> : vector<8x8xf32>
    %17 = tpu.matmul %12, %14, %cst_9 {dimension_numbers = #tpu.dot_dimension_numbers<[1], [1], [0], [0], [0, 0, 1, 0], [], []>} : vector<8x32xbf16>, vector<8x32xbf16>, vector<8x8xf32> -> vector<8x8xf32>
    %18 = arith.addf %17, %10 : vector<8x8xf32>
    %cst_10 = arith.constant dense<0xFF800000> : vector<8xf32>
    %19 = vector.multi_reduction <maximumf>, %18, %cst_10 [1] : vector<8x8xf32> to vector<8xf32>
    %20 = vector.shape_cast %19 : vector<8xf32> to vector<8x1xf32>
    %21 = vector.broadcast %20 : vector<8x1xf32> to vector<8x8xf32>
    %22 = arith.subf %18, %21 : vector<8x8xf32>
    %23 = math.exp %22 : vector<8x8xf32>
    %cst_11 = arith.constant dense<0.000000e+00> : vector<8xf32>
    %24 = vector.multi_reduction <add>, %23, %cst_11 [1] : vector<8x8xf32> to vector<8xf32>
    %25 = vector.shape_cast %24 : vector<8xf32> to vector<8x1xf32>
    %26 = vector.broadcast %25 : vector<8x1xf32> to vector<8x8xf32>
    %27 = arith.divf %23, %26 : vector<8x8xf32>
    %28 = arith.truncf %27 : vector<8x8xf32> to vector<8x8xbf16>
    %cst_12 = arith.constant dense<0.000000e+00> : vector<8x32xf32>
    %29 = tpu.matmul %28, %16, %cst_12 {dimension_numbers = #tpu.dot_dimension_numbers<[1], [0], [0], [1], [0, 0, 1, 1], [], []>} : vector<8x8xbf16>, vector<8x32xbf16>, vector<8x32xf32> -> vector<8x32xf32>
    %30 = arith.truncf %29 : vector<8x32xf32> to vector<8x32xbf16>
    %31 = vector.extract_strided_slice %4 {offsets = [0, 32], sizes = [8, 32], strides = [1, 1]} : vector<16x384xf32> to vector<8x32xf32>
    %32 = arith.truncf %31 : vector<8x32xf32> to vector<8x32xbf16>
    %33 = vector.extract_strided_slice %4 {offsets = [0, 160], sizes = [8, 32], strides = [1, 1]} : vector<16x384xf32> to vector<8x32xf32>
    %34 = arith.truncf %33 : vector<8x32xf32> to vector<8x32xbf16>
    %35 = vector.extract_strided_slice %4 {offsets = [0, 288], sizes = [8, 32], strides = [1, 1]} : vector<16x384xf32> to vector<8x32xf32>
    %36 = arith.truncf %35 : vector<8x32xf32> to vector<8x32xbf16>
    %cst_13 = arith.constant dense<0.000000e+00> : vector<8x8xf32>
    %37 = tpu.matmul %32, %34, %cst_13 {dimension_numbers = #tpu.dot_dimension_numbers<[1], [1], [0], [0], [0, 0, 1, 0], [], []>} : vector<8x32xbf16>, vector<8x32xbf16>, vector<8x8xf32> -> vector<8x8xf32>
    %38 = arith.addf %37, %10 : vector<8x8xf32>
    %cst_14 = arith.constant dense<0xFF800000> : vector<8xf32>
    %39 = vector.multi_reduction <maximumf>, %38, %cst_14 [1] : vector<8x8xf32> to vector<8xf32>
    %40 = vector.shape_cast %39 : vector<8xf32> to vector<8x1xf32>
    %41 = vector.broadcast %40 : vector<8x1xf32> to vector<8x8xf32>
    %42 = arith.subf %38, %41 : vector<8x8xf32>
    %43 = math.exp %42 : vector<8x8xf32>
    %cst_15 = arith.constant dense<0.000000e+00> : vector<8xf32>
    %44 = vector.multi_reduction <add>, %43, %cst_15 [1] : vector<8x8xf32> to vector<8xf32>
    %45 = vector.shape_cast %44 : vector<8xf32> to vector<8x1xf32>
    %46 = vector.broadcast %45 : vector<8x1xf32> to vector<8x8xf32>
    %47 = arith.divf %43, %46 : vector<8x8xf32>
    %48 = arith.truncf %47 : vector<8x8xf32> to vector<8x8xbf16>
    %cst_16 = arith.constant dense<0.000000e+00> : vector<8x32xf32>
    %49 = tpu.matmul %48, %36, %cst_16 {dimension_numbers = #tpu.dot_dimension_numbers<[1], [0], [0], [1], [0, 0, 1, 1], [], []>} : vector<8x8xbf16>, vector<8x32xbf16>, vector<8x32xf32> -> vector<8x32xf32>
    %50 = arith.truncf %49 : vector<8x32xf32> to vector<8x32xbf16>
    %51 = vector.extract_strided_slice %4 {offsets = [0, 64], sizes = [8, 32], strides = [1, 1]} : vector<16x384xf32> to vector<8x32xf32>
    %52 = arith.truncf %51 : vector<8x32xf32> to vector<8x32xbf16>
    %53 = vector.extract_strided_slice %4 {offsets = [0, 192], sizes = [8, 32], strides = [1, 1]} : vector<16x384xf32> to vector<8x32xf32>
    %54 = arith.truncf %53 : vector<8x32xf32> to vector<8x32xbf16>
    %55 = vector.extract_strided_slice %4 {offsets = [0, 320], sizes = [8, 32], strides = [1, 1]} : vector<16x384xf32> to vector<8x32xf32>
    %56 = arith.truncf %55 : vector<8x32xf32> to vector<8x32xbf16>
    %cst_17 = arith.constant dense<0.000000e+00> : vector<8x8xf32>
    %57 = tpu.matmul %52, %54, %cst_17 {dimension_numbers = #tpu.dot_dimension_numbers<[1], [1], [0], [0], [0, 0, 1, 0], [], []>} : vector<8x32xbf16>, vector<8x32xbf16>, vector<8x8xf32> -> vector<8x8xf32>
    %58 = arith.addf %57, %10 : vector<8x8xf32>
    %cst_18 = arith.constant dense<0xFF800000> : vector<8xf32>
    %59 = vector.multi_reduction <maximumf>, %58, %cst_18 [1] : vector<8x8xf32> to vector<8xf32>
    %60 = vector.shape_cast %59 : vector<8xf32> to vector<8x1xf32>
    %61 = vector.broadcast %60 : vector<8x1xf32> to vector<8x8xf32>
    %62 = arith.subf %58, %61 : vector<8x8xf32>
    %63 = math.exp %62 : vector<8x8xf32>
    %cst_19 = arith.constant dense<0.000000e+00> : vector<8xf32>
    %64 = vector.multi_reduction <add>, %63, %cst_19 [1] : vector<8x8xf32> to vector<8xf32>
    %65 = vector.shape_cast %64 : vector<8xf32> to vector<8x1xf32>
    %66 = vector.broadcast %65 : vector<8x1xf32> to vector<8x8xf32>
    %67 = arith.divf %63, %66 : vector<8x8xf32>
    %68 = arith.truncf %67 : vector<8x8xf32> to vector<8x8xbf16>
    %cst_20 = arith.constant dense<0.000000e+00> : vector<8x32xf32>
    %69 = tpu.matmul %68, %56, %cst_20 {dimension_numbers = #tpu.dot_dimension_numbers<[1], [0], [0], [1], [0, 0, 1, 1], [], []>} : vector<8x8xbf16>, vector<8x32xbf16>, vector<8x32xf32> -> vector<8x32xf32>
    %70 = arith.truncf %69 : vector<8x32xf32> to vector<8x32xbf16>
    %71 = vector.extract_strided_slice %4 {offsets = [0, 96], sizes = [8, 32], strides = [1, 1]} : vector<16x384xf32> to vector<8x32xf32>
    %72 = arith.truncf %71 : vector<8x32xf32> to vector<8x32xbf16>
    %73 = vector.extract_strided_slice %4 {offsets = [0, 224], sizes = [8, 32], strides = [1, 1]} : vector<16x384xf32> to vector<8x32xf32>
    %74 = arith.truncf %73 : vector<8x32xf32> to vector<8x32xbf16>
    %75 = vector.extract_strided_slice %4 {offsets = [0, 352], sizes = [8, 32], strides = [1, 1]} : vector<16x384xf32> to vector<8x32xf32>
    %76 = arith.truncf %75 : vector<8x32xf32> to vector<8x32xbf16>
    %cst_21 = arith.constant dense<0.000000e+00> : vector<8x8xf32>
    %77 = tpu.matmul %72, %74, %cst_21 {dimension_numbers = #tpu.dot_dimension_numbers<[1], [1], [0], [0], [0, 0, 1, 0], [], []>} : vector<8x32xbf16>, vector<8x32xbf16>, vector<8x8xf32> -> vector<8x8xf32>
    %78 = arith.addf %77, %10 : vector<8x8xf32>
    %cst_22 = arith.constant dense<0xFF800000> : vector<8xf32>
    %79 = vector.multi_reduction <maximumf>, %78, %cst_22 [1] : vector<8x8xf32> to vector<8xf32>
    %80 = vector.shape_cast %79 : vector<8xf32> to vector<8x1xf32>
    %81 = vector.broadcast %80 : vector<8x1xf32> to vector<8x8xf32>
    %82 = arith.subf %78, %81 : vector<8x8xf32>
    %83 = math.exp %82 : vector<8x8xf32>
    %cst_23 = arith.constant dense<0.000000e+00> : vector<8xf32>
    %84 = vector.multi_reduction <add>, %83, %cst_23 [1] : vector<8x8xf32> to vector<8xf32>
    %85 = vector.shape_cast %84 : vector<8xf32> to vector<8x1xf32>
    %86 = vector.broadcast %85 : vector<8x1xf32> to vector<8x8xf32>
    %87 = arith.divf %83, %86 : vector<8x8xf32>
    %88 = arith.truncf %87 : vector<8x8xf32> to vector<8x8xbf16>
    %cst_24 = arith.constant dense<0.000000e+00> : vector<8x32xf32>
    %89 = tpu.matmul %88, %76, %cst_24 {dimension_numbers = #tpu.dot_dimension_numbers<[1], [0], [0], [1], [0, 0, 1, 1], [], []>} : vector<8x8xbf16>, vector<8x32xbf16>, vector<8x32xf32> -> vector<8x32xf32>
    %90 = arith.truncf %89 : vector<8x32xf32> to vector<8x32xbf16>
    %91 = tpu.concatenate %30, %50, %70, %90 in 1 : vector<8x32xbf16>, vector<8x32xbf16>, vector<8x32xbf16>, vector<8x32xbf16> -> vector<8x128xbf16>
    %cst_25 = arith.constant dense<0.000000e+00> : vector<8x128xf32>
    %92 = tpu.matmul %91, %2, %cst_25 {dimension_numbers = #tpu.dot_dimension_numbers<[1], [0], [0], [1], [0, 0, 1, 1], [], []>} : vector<8x128xbf16>, vector<128x128xbf16>, vector<8x128xf32> -> vector<8x128xf32>
    %93 = vector.broadcast %3 : vector<1x128xf32> to vector<8x128xf32>
    %94 = arith.addf %92, %93 : vector<8x128xf32>
    %c0_26 = arith.constant 0 : index
    %c0_27 = arith.constant 0 : index
    %95 = vector.load %arg5[%c0_26, %c0_27] : memref<16x128xf32, #tpu.memory_space<vmem>>, vector<8x128xf32>
    tpu.vector_store %arg5[%c0_26, %c0_27], %94 {strides = array<i32>} : memref<16x128xf32, #tpu.memory_space<vmem>>, vector<8x128xf32>,
    %96 = vector.extract_strided_slice %4 {offsets = [8, 0], sizes = [8, 32], strides = [1, 1]} : vector<16x384xf32> to vector<8x32xf32>
    %97 = arith.truncf %96 : vector<8x32xf32> to vector<8x32xbf16>
    %98 = vector.extract_strided_slice %4 {offsets = [8, 128], sizes = [8, 32], strides = [1, 1]} : vector<16x384xf32> to vector<8x32xf32>
    %99 = arith.truncf %98 : vector<8x32xf32> to vector<8x32xbf16>
    %100 = vector.extract_strided_slice %4 {offsets = [8, 256], sizes = [8, 32], strides = [1, 1]} : vector<16x384xf32> to vector<8x32xf32>
    %101 = arith.truncf %100 : vector<8x32xf32> to vector<8x32xbf16>
    %cst_28 = arith.constant dense<0.000000e+00> : vector<8x8xf32>
    %102 = tpu.matmul %97, %99, %cst_28 {dimension_numbers = #tpu.dot_dimension_numbers<[1], [1], [0], [0], [0, 0, 1, 0], [], []>} : vector<8x32xbf16>, vector<8x32xbf16>, vector<8x8xf32> -> vector<8x8xf32>
    %103 = arith.addf %102, %10 : vector<8x8xf32>
    %cst_29 = arith.constant dense<0xFF800000> : vector<8xf32>
    %104 = vector.multi_reduction <maximumf>, %103, %cst_29 [1] : vector<8x8xf32> to vector<8xf32>
    %105 = vector.shape_cast %104 : vector<8xf32> to vector<8x1xf32>
    %106 = vector.broadcast %105 : vector<8x1xf32> to vector<8x8xf32>
    %107 = arith.subf %103, %106 : vector<8x8xf32>
    %108 = math.exp %107 : vector<8x8xf32>
    %cst_30 = arith.constant dense<0.000000e+00> : vector<8xf32>
    %109 = vector.multi_reduction <add>, %108, %cst_30 [1] : vector<8x8xf32> to vector<8xf32>
    %110 = vector.shape_cast %109 : vector<8xf32> to vector<8x1xf32>
    %111 = vector.broadcast %110 : vector<8x1xf32> to vector<8x8xf32>
    %112 = arith.divf %108, %111 : vector<8x8xf32>
    %113 = arith.truncf %112 : vector<8x8xf32> to vector<8x8xbf16>
    %cst_31 = arith.constant dense<0.000000e+00> : vector<8x32xf32>
    %114 = tpu.matmul %113, %101, %cst_31 {dimension_numbers = #tpu.dot_dimension_numbers<[1], [0], [0], [1], [0, 0, 1, 1], [], []>} : vector<8x8xbf16>, vector<8x32xbf16>, vector<8x32xf32> -> vector<8x32xf32>
    %115 = arith.truncf %114 : vector<8x32xf32> to vector<8x32xbf16>
    %116 = vector.extract_strided_slice %4 {offsets = [8, 32], sizes = [8, 32], strides = [1, 1]} : vector<16x384xf32> to vector<8x32xf32>
    %117 = arith.truncf %116 : vector<8x32xf32> to vector<8x32xbf16>
    %118 = vector.extract_strided_slice %4 {offsets = [8, 160], sizes = [8, 32], strides = [1, 1]} : vector<16x384xf32> to vector<8x32xf32>
    %119 = arith.truncf %118 : vector<8x32xf32> to vector<8x32xbf16>
    %120 = vector.extract_strided_slice %4 {offsets = [8, 288], sizes = [8, 32], strides = [1, 1]} : vector<16x384xf32> to vector<8x32xf32>
    %121 = arith.truncf %120 : vector<8x32xf32> to vector<8x32xbf16>
    %cst_32 = arith.constant dense<0.000000e+00> : vector<8x8xf32>
    %122 = tpu.matmul %117, %119, %cst_32 {dimension_numbers = #tpu.dot_dimension_numbers<[1], [1], [0], [0], [0, 0, 1, 0], [], []>} : vector<8x32xbf16>, vector<8x32xbf16>, vector<8x8xf32> -> vector<8x8xf32>
    %123 = arith.addf %122, %10 : vector<8x8xf32>
    %cst_33 = arith.constant dense<0xFF800000> : vector<8xf32>
    %124 = vector.multi_reduction <maximumf>, %123, %cst_33 [1] : vector<8x8xf32> to vector<8xf32>
    %125 = vector.shape_cast %124 : vector<8xf32> to vector<8x1xf32>
    %126 = vector.broadcast %125 : vector<8x1xf32> to vector<8x8xf32>
    %127 = arith.subf %123, %126 : vector<8x8xf32>
    %128 = math.exp %127 : vector<8x8xf32>
    %cst_34 = arith.constant dense<0.000000e+00> : vector<8xf32>
    %129 = vector.multi_reduction <add>, %128, %cst_34 [1] : vector<8x8xf32> to vector<8xf32>
    %130 = vector.shape_cast %129 : vector<8xf32> to vector<8x1xf32>
    %131 = vector.broadcast %130 : vector<8x1xf32> to vector<8x8xf32>
    %132 = arith.divf %128, %131 : vector<8x8xf32>
    %133 = arith.truncf %132 : vector<8x8xf32> to vector<8x8xbf16>
    %cst_35 = arith.constant dense<0.000000e+00> : vector<8x32xf32>
    %134 = tpu.matmul %133, %121, %cst_35 {dimension_numbers = #tpu.dot_dimension_numbers<[1], [0], [0], [1], [0, 0, 1, 1], [], []>} : vector<8x8xbf16>, vector<8x32xbf16>, vector<8x32xf32> -> vector<8x32xf32>
    %135 = arith.truncf %134 : vector<8x32xf32> to vector<8x32xbf16>
    %136 = vector.extract_strided_slice %4 {offsets = [8, 64], sizes = [8, 32], strides = [1, 1]} : vector<16x384xf32> to vector<8x32xf32>
    %137 = arith.truncf %136 : vector<8x32xf32> to vector<8x32xbf16>
    %138 = vector.extract_strided_slice %4 {offsets = [8, 192], sizes = [8, 32], strides = [1, 1]} : vector<16x384xf32> to vector<8x32xf32>
    %139 = arith.truncf %138 : vector<8x32xf32> to vector<8x32xbf16>
    %140 = vector.extract_strided_slice %4 {offsets = [8, 320], sizes = [8, 32], strides = [1, 1]} : vector<16x384xf32> to vector<8x32xf32>
    %141 = arith.truncf %140 : vector<8x32xf32> to vector<8x32xbf16>
    %cst_36 = arith.constant dense<0.000000e+00> : vector<8x8xf32>
    %142 = tpu.matmul %137, %139, %cst_36 {dimension_numbers = #tpu.dot_dimension_numbers<[1], [1], [0], [0], [0, 0, 1, 0], [], []>} : vector<8x32xbf16>, vector<8x32xbf16>, vector<8x8xf32> -> vector<8x8xf32>
    %143 = arith.addf %142, %10 : vector<8x8xf32>
    %cst_37 = arith.constant dense<0xFF800000> : vector<8xf32>
    %144 = vector.multi_reduction <maximumf>, %143, %cst_37 [1] : vector<8x8xf32> to vector<8xf32>
    %145 = vector.shape_cast %144 : vector<8xf32> to vector<8x1xf32>
    %146 = vector.broadcast %145 : vector<8x1xf32> to vector<8x8xf32>
    %147 = arith.subf %143, %146 : vector<8x8xf32>
    %148 = math.exp %147 : vector<8x8xf32>
    %cst_38 = arith.constant dense<0.000000e+00> : vector<8xf32>
    %149 = vector.multi_reduction <add>, %148, %cst_38 [1] : vector<8x8xf32> to vector<8xf32>
    %150 = vector.shape_cast %149 : vector<8xf32> to vector<8x1xf32>
    %151 = vector.broadcast %150 : vector<8x1xf32> to vector<8x8xf32>
    %152 = arith.divf %148, %151 : vector<8x8xf32>
    %153 = arith.truncf %152 : vector<8x8xf32> to vector<8x8xbf16>
    %cst_39 = arith.constant dense<0.000000e+00> : vector<8x32xf32>
    %154 = tpu.matmul %153, %141, %cst_39 {dimension_numbers = #tpu.dot_dimension_numbers<[1], [0], [0], [1], [0, 0, 1, 1], [], []>} : vector<8x8xbf16>, vector<8x32xbf16>, vector<8x32xf32> -> vector<8x32xf32>
    %155 = arith.truncf %154 : vector<8x32xf32> to vector<8x32xbf16>
    %156 = vector.extract_strided_slice %4 {offsets = [8, 96], sizes = [8, 32], strides = [1, 1]} : vector<16x384xf32> to vector<8x32xf32>
    %157 = arith.truncf %156 : vector<8x32xf32> to vector<8x32xbf16>
    %158 = vector.extract_strided_slice %4 {offsets = [8, 224], sizes = [8, 32], strides = [1, 1]} : vector<16x384xf32> to vector<8x32xf32>
    %159 = arith.truncf %158 : vector<8x32xf32> to vector<8x32xbf16>
    %160 = vector.extract_strided_slice %4 {offsets = [8, 352], sizes = [8, 32], strides = [1, 1]} : vector<16x384xf32> to vector<8x32xf32>
    %161 = arith.truncf %160 : vector<8x32xf32> to vector<8x32xbf16>
    %cst_40 = arith.constant dense<0.000000e+00> : vector<8x8xf32>
    %162 = tpu.matmul %157, %159, %cst_40 {dimension_numbers = #tpu.dot_dimension_numbers<[1], [1], [0], [0], [0, 0, 1, 0], [], []>} : vector<8x32xbf16>, vector<8x32xbf16>, vector<8x8xf32> -> vector<8x8xf32>
    %163 = arith.addf %162, %10 : vector<8x8xf32>
    %cst_41 = arith.constant dense<0xFF800000> : vector<8xf32>
    %164 = vector.multi_reduction <maximumf>, %163, %cst_41 [1] : vector<8x8xf32> to vector<8xf32>
    %165 = vector.shape_cast %164 : vector<8xf32> to vector<8x1xf32>
    %166 = vector.broadcast %165 : vector<8x1xf32> to vector<8x8xf32>
    %167 = arith.subf %163, %166 : vector<8x8xf32>
    %168 = math.exp %167 : vector<8x8xf32>
    %cst_42 = arith.constant dense<0.000000e+00> : vector<8xf32>
    %169 = vector.multi_reduction <add>, %168, %cst_42 [1] : vector<8x8xf32> to vector<8xf32>
    %170 = vector.shape_cast %169 : vector<8xf32> to vector<8x1xf32>
    %171 = vector.broadcast %170 : vector<8x1xf32> to vector<8x8xf32>
    %172 = arith.divf %168, %171 : vector<8x8xf32>
    %173 = arith.truncf %172 : vector<8x8xf32> to vector<8x8xbf16>
    %cst_43 = arith.constant dense<0.000000e+00> : vector<8x32xf32>
    %174 = tpu.matmul %173, %161, %cst_43 {dimension_numbers = #tpu.dot_dimension_numbers<[1], [0], [0], [1], [0, 0, 1, 1], [], []>} : vector<8x8xbf16>, vector<8x32xbf16>, vector<8x32xf32> -> vector<8x32xf32>
    %175 = arith.truncf %174 : vector<8x32xf32> to vector<8x32xbf16>
    %176 = tpu.concatenate %115, %135, %155, %175 in 1 : vector<8x32xbf16>, vector<8x32xbf16>, vector<8x32xbf16>, vector<8x32xbf16> -> vector<8x128xbf16>
    %cst_44 = arith.constant dense<0.000000e+00> : vector<8x128xf32>
    %177 = tpu.matmul %176, %2, %cst_44 {dimension_numbers = #tpu.dot_dimension_numbers<[1], [0], [0], [1], [0, 0, 1, 1], [], []>} : vector<8x128xbf16>, vector<128x128xbf16>, vector<8x128xf32> -> vector<8x128xf32>
    %178 = vector.broadcast %3 : vector<1x128xf32> to vector<8x128xf32>
    %179 = arith.addf %177, %178 : vector<8x128xf32>
    %c8 = arith.constant 8 : index
    %c0_45 = arith.constant 0 : index
    %180 = vector.load %arg5[%c8, %c0_45] : memref<16x128xf32, #tpu.memory_space<vmem>>, vector<8x128xf32>
    tpu.vector_store %arg5[%c8, %c0_45], %179 {strides = array<i32>} : memref<16x128xf32, #tpu.memory_space<vmem>>, vector<8x128xf32>,
    return
  }
  func.func @transform_0(%arg0: i32) -> (i32, i32) {
    %c0_i32 = arith.constant 0 : i32
    %c0_i32_0 = arith.constant 0 : i32
    return %arg0, %c0_i32 : i32, i32
  }
  func.func @transform_1(%arg0: i32) -> (i32, i32) {
    %c0_i32 = arith.constant 0 : i32
    %c0_i32_0 = arith.constant 0 : i32
    %c0_i32_1 = arith.constant 0 : i32
    return %c0_i32, %c0_i32_0 : i32, i32
  }
  func.func @transform_2(%arg0: i32) -> (i32, i32) {
    %c0_i32 = arith.constant 0 : i32
    %c0_i32_0 = arith.constant 0 : i32
    %c0_i32_1 = arith.constant 0 : i32
    return %c0_i32, %c0_i32_0 : i32, i32
  }
  func.func @transform_3(%arg0: i32) -> (i32, i32) {
    %c0_i32 = arith.constant 0 : i32
    %c0_i32_0 = arith.constant 0 : i32
    %c0_i32_1 = arith.constant 0 : i32
    return %c0_i32, %c0_i32_0 : i32, i32
  }
  func.func @transform_4(%arg0: i32) -> (i32, i32) {
    %c0_i32 = arith.constant 0 : i32
    %c0_i32_0 = arith.constant 0 : i32
    return %arg0, %c0_i32 : i32, i32
  }
}

</mosaic_0001>

<llo_original>
// kernel: tpu_custom_call.1
$region0: #{tpu_custom_call.1}
  #allocation0 [shape = 'u32[]', space=smem, size = 0x4, offset = 0x4, fixed_abs, tag = 'smem constant byte address 0x4 - core index']
  #allocation1 [shape = 'u32[144,128]{1,0:T(1,128)}', space=vmem, size = 0x12000, scoped, tag = 'internal scratch']
  %s0 = inlined_call_operand.hbm [shape: bf16[16,32], index: 0, kind: input, shape index: {}]
  %s1 = inlined_call_operand.hbm [shape: bf16[32,384], index: 1, kind: input, shape index: {}]
  %s2 = inlined_call_operand.hbm [shape: bf16[128,128], index: 2, kind: input, shape index: {}]
  %s3 = inlined_call_operand.vmem [shape: f32[1,128], index: 3, kind: input, shape index: {}]
  %s4 = inlined_call_operand.hbm [shape: f32[16,128], index: 4, kind: output, shape index: {}]
  %s5 = sld [smem:[#allocation0]]
  $region38: #{tpu_custom_call.1} parent=0
    _
  %s7 = ssub.s32 1, %s5
  %s8 = scalar_select 0, %s7, %s5
  $region1: #{tpu_custom_call.1} parent=0
    #allocation2 [shape = 'u8[4096]{0}', space=vmem, size = 0x1000, scoped, tag = 'input window, operand 0, single buffered']
    #allocation3 [shape = 's32[1]{0}', space=sflag, size = 0x4, scoped, tag = 'scoped memory for tpu_custom_call.1']
    #allocation4 [shape = 's32[1]{0}', space=sflag, size = 0x4, scoped, tag = 'scoped memory for tpu_custom_call.1']
    #allocation5 [shape = 'u8[24576]{0}', space=vmem, size = 0x6000, scoped, tag = 'input window, operand 1, single buffered']
    #allocation6 [shape = 's32[1]{0}', space=sflag, size = 0x4, scoped, tag = 'scoped memory for tpu_custom_call.1']
    #allocation7 [shape = 'u8[32768]{0}', space=vmem, size = 0x8000, scoped, tag = 'input window, operand 2, single buffered']
    #allocation8 [shape = 'u8[8192]{0}', space=vmem, size = 0x2000, scoped, tag = 'output window, operand 0, single buffered']
    %9 = vsyncpa [#allocation3], 0
    %10 = vsyncpa [#allocation6], 0
    %11 = vsyncpa [#allocation4], 0
    // Predicated region
    $region2: #{tpu_custom_call.1} parent=1 // pred_check
      _
    $region3: #{tpu_custom_call.1} parent=1 // pred_check_branch
      %13 = sbr.rel (0) target = $region5
    $region4: #{tpu_custom_call.1} parent=1 // pred_region
      %s15 = ssub.s32 128, 128
      %16 = vsyncadd [#allocation3], %s15
      %s17 = sshll.u32 [#allocation2], 4
      %s18 = int_to_ptr.vmem [resolvable:$true] %s17
      %23 = dma.hbm_to_vmem [thread:$0]  %s0, 128, %s18, [#allocation3], 64, 64, 4
    $region5: #{tpu_custom_call.1} parent=1 // pred_fallthru
      _
    // Predicated region
    $region6: #{tpu_custom_call.1} parent=1 // pred_check
      _
    $region7: #{tpu_custom_call.1} parent=1 // pred_check_branch
      %25 = sbr.rel (0) target = $region9
    $region8: #{tpu_custom_call.1} parent=1 // pred_region
      %s27 = ssub.s32 768, 768
      %28 = vsyncadd [#allocation6], %s27
      %s29 = sshll.u32 [#allocation5], 4
      %s30 = int_to_ptr.vmem [resolvable:$true] %s29
      %35 = dma.hbm_to_vmem [thread:$0]  %s1, 768, %s30, [#allocation6], 192, 192, 12
    $region9: #{tpu_custom_call.1} parent=1 // pred_fallthru
      _
    // Predicated region
    $region10: #{tpu_custom_call.1} parent=1 // pred_check
      _
    $region11: #{tpu_custom_call.1} parent=1 // pred_check_branch
      %37 = sbr.rel (0) target = $region13
    $region12: #{tpu_custom_call.1} parent=1 // pred_region
      %s39 = ssub.s32 1024, 1024
      %40 = vsyncadd [#allocation6], %s39
      %s41 = sshll.u32 [#allocation7], 4
      %s42 = int_to_ptr.vmem [resolvable:$true] %s41
      %47 = dma.hbm_to_vmem [thread:$0]  %s2, 1024, %s42, [#allocation6], 64, 64, 4
    $region13: #{tpu_custom_call.1} parent=1 // pred_fallthru
      _
    // Predicated region
    $region14: #{tpu_custom_call.1} parent=1 // pred_check
      _
    $region15: #{tpu_custom_call.1} parent=1 // pred_check_branch
      %49 = sbr.rel (0) target = $region17
    $region16: #{tpu_custom_call.1} parent=1 // pred_region
      _
    $region17: #{tpu_custom_call.1} parent=1 // pred_fallthru
      _
    // Predicated region
    $region18: #{tpu_custom_call.1} parent=1 // pred_check
      _
    $region19: #{tpu_custom_call.1} parent=1 // pred_check_branch
      %51 = sbr.rel (0) target = $region21
    $region20: #{tpu_custom_call.1} parent=1 // pred_region
      %52 = dma.done [#allocation3], 128
    $region21: #{tpu_custom_call.1} parent=1 // pred_fallthru
      _
    // Predicated region
    $region22: #{tpu_custom_call.1} parent=1 // pred_check
      _
    $region23: #{tpu_custom_call.1} parent=1 // pred_check_branch
      %54 = sbr.rel (0) target = $region25
    $region24: #{tpu_custom_call.1} parent=1 // pred_region
      %55 = dma.done [#allocation6], 768
    $region25: #{tpu_custom_call.1} parent=1 // pred_fallthru
      _
    // Predicated region
    $region26: #{tpu_custom_call.1} parent=1 // pred_check
      _
    $region27: #{tpu_custom_call.1} parent=1 // pred_check_branch
      %57 = sbr.rel (0) target = $region29
    $region28: #{tpu_custom_call.1} parent=1 // pred_region
      %58 = dma.done [#allocation6], 1024
    $region29: #{tpu_custom_call.1} parent=1 // pred_fallthru
      _
    %v60 = vld [vmem:[#allocation2] sm:$0xf]
    %v61 = vld [vmem:[#allocation2 + $0x4] sm:$0xf]
    %v62 = vld [vmem:[#allocation5] sm:$0xff]
    %v63 = vld [vmem:[#allocation5 + $0x8] sm:$0xf]
    %v64 = vld [vmem:[#allocation5 + $0xc] sm:$0xff]
    %v65 = vld [vmem:[#allocation5 + $0x14] sm:$0xf]
    %v66 = vld [vmem:[#allocation5 + $0x18] sm:$0xff]
    %v67 = vld [vmem:[#allocation5 + $0x20] sm:$0xf]
    %v68 = vld [vmem:[#allocation5 + $0x24] sm:$0xff]
    %v69 = vld [vmem:[#allocation5 + $0x2c] sm:$0xf]
    %v70 = vld [vmem:[#allocation7] sm:$0xf]
    %v71 = vld [vmem:[#allocation7 + $0x4] sm:$0xf]
    %v72 = vld [vmem:[#allocation7 + $0x8] sm:$0xf]
    %v73 = vld [vmem:[#allocation7 + $0xc] sm:$0xf]
    %v74 = vld [vmem:[#allocation7 + $0x10] sm:$0xf]
    %v75 = vld [vmem:[#allocation7 + $0x14] sm:$0xf]
    %v76 = vld [vmem:[#allocation7 + $0x18] sm:$0xf]
    %v77 = vld [vmem:[#allocation7 + $0x1c] sm:$0xf]
    %v78 = vld [vmem:[#allocation7 + $0x20] sm:$0xf]
    %v79 = vld [vmem:[#allocation7 + $0x24] sm:$0xf]
    %v80 = vld [vmem:[#allocation7 + $0x28] sm:$0xf]
    %v81 = vld [vmem:[#allocation7 + $0x2c] sm:$0xf]
    %v82 = vld [vmem:[#allocation7 + $0x30] sm:$0xf]
    %v83 = vld [vmem:[#allocation7 + $0x34] sm:$0xf]
    %v84 = vld [vmem:[#allocation7 + $0x38] sm:$0xf]
    %v85 = vld [vmem:[#allocation7 + $0x3c] sm:$0xf]
    %v86 = vld [vmem:[%s3] sm:$0x1]
    %v89 = vunpack.c.l.b16 %v60
    %v90 = vunpack.c.l.b16 %v61
    %v91 = vpack.c.b16 %v90, %v89
    %v100 = vunpack.c.l.b16 %v62
    %v101 = vunpack.c.h.b16 %v62
    %v102 = vunpack.c.l.b16 %v63
    %v103 = vunpack.c.l.b16 %v64
    %v104 = vunpack.c.h.b16 %v64
    %v105 = vunpack.c.l.b16 %v65
    %v106 = vunpack.c.l.b16 %v66
    %v107 = vunpack.c.h.b16 %v66
    %v108 = vunpack.c.l.b16 %v67
    %v109 = vunpack.c.l.b16 %v68
    %v110 = vunpack.c.h.b16 %v68
    %v111 = vunpack.c.l.b16 %v69
    %v112 = vpack.c.b16 %v103, %v100
    %v113 = vpack.c.b16 %v104, %v101
    %v114 = vpack.c.b16 %v105, %v102
    %v115 = vpack.c.b16 %v109, %v106
    %v116 = vpack.c.b16 %v110, %v107
    %v117 = vpack.c.b16 %v111, %v108
    %vm124 = vcmask 261120
    %v126 = vsel %vm124, %v91, 0
    %128 = vmatprep.subr.bf16.mxu0 %v113
    %129 = vmatpush1.bf16.msra.mxu0 %v112
    %130 = vmatprep.subr.bf16.mxu0 %v116
    %131 = vmatpush1.bf16.msra.mxu0 %v115
    %132 = vmatprep.subr.bf16.mxu0 0
    %133 = vmatpush1.bf16.msra.mxu0 0
    %134 = vmatprep.subr.bf16.mxu0 0
    %135 = vmatpush1.bf16.msra.mxu0 0
    %136 = vmatprep.subr.bf16.mxu0 0
    %137 = vmatpush1.bf16.msra.mxu0 0
    %138 = vmatprep.subr.bf16.mxu0 0
    %139 = vmatpush1.bf16.msra.mxu0 0
    %140 = vmatprep.subr.bf16.mxu0 0
    %141 = vmatpush1.bf16.msra.mxu0 0
    %142 = vmatprep.subr.bf16.mxu0 0
    %143 = vmatpush1.bf16.msra.mxu0 0
    %144 = vmatprep.subr.bf16.mxu0 0
    %145 = vmatpush1.bf16.msra.mxu0 0
    %146 = vmatprep.subr.bf16.mxu0 0
    %147 = vmatpush1.bf16.msra.mxu0 0
    %148 = vmatprep.subr.bf16.mxu0 0
    %149 = vmatpush1.bf16.msra.mxu0 0
    %150 = vmatprep.subr.bf16.mxu0 0
    %151 = vmatpush1.bf16.msra.mxu0 0
    %152 = vmatprep.subr.bf16.mxu0 0
    %153 = vmatpush1.bf16.msra.mxu0 0
    %154 = vmatprep.subr.bf16.mxu0 0
    %155 = vmatpush1.bf16.msra.mxu0 0
    %156 = vmatprep.subr.bf16.mxu0 0
    %157 = vmatpush1.bf16.msra.mxu0 0
    %158 = vmatprep.subr.bf16.mxu0 0
    %159 = vmatpush1.bf16.msra.mxu0 0
    %160 = vmatprep.mubr.bf16.mxu0 0
    %161 = vmatmul.mubr.bf16.gmra.mrb[0].mxu0 %v126
    %v162 = vpop.f32.mrb[0].mxu0
    %v163 = vadd.f32 0.0, %v162
    %v164 = vpop.f32.mrb[0].mxu0
    %v165 = vadd.f32 0.0, %v164
    %v166 = vpop.f32.mrb[0].mxu0
    %v167 = vadd.f32 0.0, %v166
    %v168 = vpop.f32.mrb[0].mxu0
    %v169 = vadd.f32 0.0, %v168
    %170 = vdwg.mxu0
    %171 = vmatprep.subr.bf16.mxu0 0
    %172 = vmatpush1.bf16.msra.mxu0 %v114
    %173 = vmatprep.subr.bf16.mxu0 0
    %174 = vmatpush1.bf16.msra.mxu0 %v117
    %175 = vmatprep.subr.bf16.mxu0 0
    %176 = vmatpush1.bf16.msra.mxu0 0
    %177 = vmatprep.subr.bf16.mxu0 0
    %178 = vmatpush1.bf16.msra.mxu0 0
    %179 = vmatprep.subr.bf16.mxu0 0
    %180 = vmatpush1.bf16.msra.mxu0 0
    %181 = vmatprep.subr.bf16.mxu0 0
    %182 = vmatpush1.bf16.msra.mxu0 0
    %183 = vmatprep.subr.bf16.mxu0 0
    %184 = vmatpush1.bf16.msra.mxu0 0
    %185 = vmatprep.subr.bf16.mxu0 0
    %186 = vmatpush1.bf16.msra.mxu0 0
    %187 = vmatprep.subr.bf16.mxu0 0
    %188 = vmatpush1.bf16.msra.mxu0 0
    %189 = vmatprep.subr.bf16.mxu0 0
    %190 = vmatpush1.bf16.msra.mxu0 0
    %191 = vmatprep.subr.bf16.mxu0 0
    %192 = vmatpush1.bf16.msra.mxu0 0
    %193 = vmatprep.subr.bf16.mxu0 0
    %194 = vmatpush1.bf16.msra.mxu0 0
    %195 = vmatprep.subr.bf16.mxu0 0
    %196 = vmatpush1.bf16.msra.mxu0 0
    %197 = vmatprep.subr.bf16.mxu0 0
    %198 = vmatpush1.bf16.msra.mxu0 0
    %199 = vmatprep.subr.bf16.mxu0 0
    %200 = vmatpush1.bf16.msra.mxu0 0
    %201 = vmatprep.subr.bf16.mxu0 0
    %202 = vmatpush1.bf16.msra.mxu0 0
    %203 = vmatprep.mubr.bf16.mxu0 0
    %204 = vmatmul.mubr.bf16.gmra.mrb[0].mxu0 %v126
    %v205 = vpop.f32.mrb[0].mxu0
    %v206 = vadd.f32 0.0, %v205
    %v207 = vpop.f32.mrb[0].mxu0
    %v208 = vpop.f32.mrb[0].mxu0
    %v209 = vadd.f32 0.0, %v208
    %v210 = vpop.f32.mrb[0].mxu0
    %211 = vdwg.mxu0
    %v212 = vlaneseq
    %v213 = vshrl.u32 %v212, 7
    %v214 = vlaneseq
    %v215 = vand.u32 %v214, 127
    %vm216 = vcmp.ge.s32.totalorder %v213, %v215
    %v217 = vsel %vm216, 0.0, -1e+30
    %v218 = vpack.c.bf16 %v163, %v163
    %v219 = vpack.c.bf16 %v165, %v165
    %v220 = vpack.c.bf16 %v206, %v206
    %v222 = vsel %vm124, %v218, 0
    %v225 = vsel %vm124, %v219, 0
    %227 = vmatprep.subr.bf16.mxu0 0
    %228 = vmatpush1.bf16.xpose.msra.mxu0 %v225
    %229 = vmatprep.subr.bf16.mxu0 0
    %230 = vmatpush1.bf16.xpose.msra.mxu0 0
    %231 = vmatprep.subr.bf16.mxu0 0
    %232 = vmatpush1.bf16.xpose.msra.mxu0 0
    %233 = vmatprep.subr.bf16.mxu0 0
    %234 = vmatpush1.bf16.xpose.msra.mxu0 0
    %235 = vmatprep.subr.bf16.mxu0 0
    %236 = vmatpush1.bf16.xpose.msra.mxu0 0
    %237 = vmatprep.subr.bf16.mxu0 0
    %238 = vmatpush1.bf16.xpose.msra.mxu0 0
    %239 = vmatprep.subr.bf16.mxu0 0
    %240 = vmatpush1.bf16.xpose.msra.mxu0 0
    %241 = vmatprep.subr.bf16.mxu0 0
    %242 = vmatpush1.bf16.xpose.msra.mxu0 0
    %243 = vmatprep.subr.bf16.mxu0 0
    %244 = vmatpush1.bf16.xpose.msra.mxu0 0
    %245 = vmatprep.subr.bf16.mxu0 0
    %246 = vmatpush1.bf16.xpose.msra.mxu0 0
    %247 = vmatprep.subr.bf16.mxu0 0
    %248 = vmatpush1.bf16.xpose.msra.mxu0 0
    %249 = vmatprep.subr.bf16.mxu0 0
    %250 = vmatpush1.bf16.xpose.msra.mxu0 0
    %251 = vmatprep.subr.bf16.mxu0 0
    %252 = vmatpush1.bf16.xpose.msra.mxu0 0
    %253 = vmatprep.subr.bf16.mxu0 0
    %254 = vmatpush1.bf16.xpose.msra.mxu0 0
    %255 = vmatprep.subr.bf16.mxu0 0
    %256 = vmatpush1.bf16.xpose.msra.mxu0 0
    %257 = vmatprep.subr.bf16.mxu0 0
    %258 = vmatpush1.bf16.xpose.msra.mxu0 0
    %259 = vmatprep.mubr.bf16.mxu0 0
    %260 = vmatmul.mubr.bf16.gmra.mrb[0].mxu0 %v222
    %v261 = vpop.f32.mrb[0].mxu0
    %v262 = vadd.f32 %v217, %v261
    %v263 = vpop.f32.mrb[0].mxu0
    %v264 = vpop.f32.mrb[0].mxu0
    %v265 = vpop.f32.mrb[0].mxu0
    %266 = vdwg.mxu0
    %vm267 = vcmask 64512
    %v268 = vsel %vm267, %v262, -inf
    %269 = vmax.xlane.f32.xlu0 %v268
    %v270 = vpop.xlane.xlu0 %269
    %v271 = vsub.f32 %v262, %v270
    %v272 = vmul.f32 %v271, 1.442695
    %v273 = vpow.pop %v272
    %v274 = vsel %vm267, %v273, 0.0
    %275 = vadd.xlane.f32.xlu0 %v274
    %v276 = vpop.xlane.xlu0 %275
    %v277 = vrcp.pop %v276
    %v278 = vmul.f32 %v273, %v277
    %v279 = vpack.c.bf16 %v278, %v278
    %v281 = vsel %vm267, %v279, 0
    %vm283 = vcmask 1043456
    %v285 = vsel %vm283, %v220, 0
    %287 = vmatprep.subr.bf16.mxu0 0
    %288 = vmatpush1.bf16.msra.mxu0 %v285
    %289 = vmatprep.subr.bf16.mxu0 0
    %290 = vmatpush1.bf16.msra.mxu0 0
    %291 = vmatprep.subr.bf16.mxu0 0
    %292 = vmatpush1.bf16.msra.mxu0 0
    %293 = vmatprep.subr.bf16.mxu0 0
    %294 = vmatpush1.bf16.msra.mxu0 0
    %295 = vmatprep.subr.bf16.mxu0 0
    %296 = vmatpush1.bf16.msra.mxu0 0
    %297 = vmatprep.subr.bf16.mxu0 0
    %298 = vmatpush1.bf16.msra.mxu0 0
    %299 = vmatprep.subr.bf16.mxu0 0
    %300 = vmatpush1.bf16.msra.mxu0 0
    %301 = vmatprep.subr.bf16.mxu0 0
    %302 = vmatpush1.bf16.msra.mxu0 0
    %303 = vmatprep.subr.bf16.mxu0 0
    %304 = vmatpush1.bf16.msra.mxu0 0
    %305 = vmatprep.subr.bf16.mxu0 0
    %306 = vmatpush1.bf16.msra.mxu0 0
    %307 = vmatprep.subr.bf16.mxu0 0
    %308 = vmatpush1.bf16.msra.mxu0 0
    %309 = vmatprep.subr.bf16.mxu0 0
    %310 = vmatpush1.bf16.msra.mxu0 0
    %311 = vmatprep.subr.bf16.mxu0 0
    %312 = vmatpush1.bf16.msra.mxu0 0
    %313 = vmatprep.subr.bf16.mxu0 0
    %314 = vmatpush1.bf16.msra.mxu0 0
    %315 = vmatprep.subr.bf16.mxu0 0
    %316 = vmatpush1.bf16.msra.mxu0 0
    %317 = vmatprep.subr.bf16.mxu0 0
    %318 = vmatpush1.bf16.msra.mxu0 0
    %319 = vmatprep.mubr.bf16.mxu0 0
    %320 = vmatmul.mubr.bf16.gmra.mrb[0].mxu0 %v281
    %v321 = vpop.f32.mrb[0].mxu0
    %v322 = vadd.f32 0.0, %v321
    %v323 = vpop.f32.mrb[0].mxu0
    %v324 = vpop.f32.mrb[0].mxu0
    %v325 = vpop.f32.mrb[0].mxu0
    %326 = vdwg.mxu0
    %v327 = vpack.c.bf16 %v322, %v322
    %329 = vrot.lane.b32.xlu0 %v218, 96
    %v330 = vpop.permute.xlu0 %329
    %332 = vrot.lane.b32.xlu0 %v219, 96
    %v333 = vpop.permute.xlu0 %332
    %v335 = vsel %vm124, %v330, 0
    %v338 = vsel %vm124, %v333, 0
    %340 = vmatprep.subr.bf16.mxu0 0
    %341 = vmatpush1.bf16.xpose.msra.mxu0 %v338
    %342 = vmatprep.subr.bf16.mxu0 0
    %343 = vmatpush1.bf16.xpose.msra.mxu0 0
    %344 = vmatprep.subr.bf16.mxu0 0
    %345 = vmatpush1.bf16.xpose.msra.mxu0 0
    %346 = vmatprep.subr.bf16.mxu0 0
    %347 = vmatpush1.bf16.xpose.msra.mxu0 0
    %348 = vmatprep.subr.bf16.mxu0 0
    %349 = vmatpush1.bf16.xpose.msra.mxu0 0
    %350 = vmatprep.subr.bf16.mxu0 0
    %351 = vmatpush1.bf16.xpose.msra.mxu0 0
    %352 = vmatprep.subr.bf16.mxu0 0
    %353 = vmatpush1.bf16.xpose.msra.mxu0 0
    %354 = vmatprep.subr.bf16.mxu0 0
    %355 = vmatpush1.bf16.xpose.msra.mxu0 0
    %356 = vmatprep.subr.bf16.mxu0 0
    %357 = vmatpush1.bf16.xpose.msra.mxu0 0
    %358 = vmatprep.subr.bf16.mxu0 0
    %359 = vmatpush1.bf16.xpose.msra.mxu0 0
    %360 = vmatprep.subr.bf16.mxu0 0
    %361 = vmatpush1.bf16.xpose.msra.mxu0 0
    %362 = vmatprep.subr.bf16.mxu0 0
    %363 = vmatpush1.bf16.xpose.msra.mxu0 0
    %364 = vmatprep.subr.bf16.mxu0 0
    %365 = vmatpush1.bf16.xpose.msra.mxu0 0
    %366 = vmatprep.subr.bf16.mxu0 0
    %367 = vmatpush1.bf16.xpose.msra.mxu0 0
    %368 = vmatprep.subr.bf16.mxu0 0
    %369 = vmatpush1.bf16.xpose.msra.mxu0 0
    %370 = vmatprep.subr.bf16.mxu0 0
    %371 = vmatpush1.bf16.xpose.msra.mxu0 0
    %372 = vmatprep.mubr.bf16.mxu0 0
    %373 = vmatmul.mubr.bf16.gmra.mrb[0].mxu0 %v335
    %v374 = vpop.f32.mrb[0].mxu0
    %v375 = vadd.f32 %v217, %v374
    %v376 = vpop.f32.mrb[0].mxu0
    %v377 = vpop.f32.mrb[0].mxu0
    %v378 = vpop.f32.mrb[0].mxu0
    %379 = vdwg.mxu0
    %v380 = vsel %vm267, %v375, -inf
    %381 = vmax.xlane.f32.xlu0 %v380
    %v382 = vpop.xlane.xlu0 %381
    %v383 = vsub.f32 %v375, %v382
    %v384 = vmul.f32 %v383, 1.442695
    %v385 = vpow.pop %v384
    %v386 = vsel %vm267, %v385, 0.0
    %387 = vadd.xlane.f32.xlu0 %v386
    %v388 = vpop.xlane.xlu0 %387
    %v389 = vrcp.pop %v388
    %v390 = vmul.f32 %v385, %v389
    %v391 = vpack.c.bf16 %v390, %v390
    %393 = vrot.lane.b32.xlu0 %v220, 96
    %v394 = vpop.permute.xlu0 %393
    %v396 = vsel %vm267, %v391, 0
    %v399 = vsel %vm283, %v394, 0
    %401 = vmatprep.subr.bf16.mxu0 0
    %402 = vmatpush1.bf16.msra.mxu0 %v399
    %403 = vmatprep.subr.bf16.mxu0 0
    %404 = vmatpush1.bf16.msra.mxu0 0
    %405 = vmatprep.subr.bf16.mxu0 0
    %406 = vmatpush1.bf16.msra.mxu0 0
    %407 = vmatprep.subr.bf16.mxu0 0
    %408 = vmatpush1.bf16.msra.mxu0 0
    %409 = vmatprep.subr.bf16.mxu0 0
    %410 = vmatpush1.bf16.msra.mxu0 0
    %411 = vmatprep.subr.bf16.mxu0 0
    %412 = vmatpush1.bf16.msra.mxu0 0
    %413 = vmatprep.subr.bf16.mxu0 0
    %414 = vmatpush1.bf16.msra.mxu0 0
    %415 = vmatprep.subr.bf16.mxu0 0
    %416 = vmatpush1.bf16.msra.mxu0 0
    %417 = vmatprep.subr.bf16.mxu0 0
    %418 = vmatpush1.bf16.msra.mxu0 0
    %419 = vmatprep.subr.bf16.mxu0 0
    %420 = vmatpush1.bf16.msra.mxu0 0
    %421 = vmatprep.subr.bf16.mxu0 0
    %422 = vmatpush1.bf16.msra.mxu0 0
    %423 = vmatprep.subr.bf16.mxu0 0
    %424 = vmatpush1.bf16.msra.mxu0 0
    %425 = vmatprep.subr.bf16.mxu0 0
    %426 = vmatpush1.bf16.msra.mxu0 0
    %427 = vmatprep.subr.bf16.mxu0 0
    %428 = vmatpush1.bf16.msra.mxu0 0
    %429 = vmatprep.subr.bf16.mxu0 0
    %430 = vmatpush1.bf16.msra.mxu0 0
    %431 = vmatprep.subr.bf16.mxu0 0
    %432 = vmatpush1.bf16.msra.mxu0 0
    %433 = vmatprep.mubr.bf16.mxu0 0
    %434 = vmatmul.mubr.bf16.gmra.mrb[0].mxu0 %v396
    %v435 = vpop.f32.mrb[0].mxu0
    %v436 = vadd.f32 0.0, %v435
    %v437 = vpop.f32.mrb[0].mxu0
    %v438 = vpop.f32.mrb[0].mxu0
    %v439 = vpop.f32.mrb[0].mxu0
    %440 = vdwg.mxu0
    %v441 = vpack.c.bf16 %v436, %v436
    %442 = vrot.lane.b32.xlu0 %v218, 64
    %v443 = vpop.permute.xlu0 %442
    %444 = vrot.lane.b32.xlu0 %v219, 64
    %v445 = vpop.permute.xlu0 %444
    %v447 = vsel %vm124, %v443, 0
    %v450 = vsel %vm124, %v445, 0
    %452 = vmatprep.subr.bf16.mxu0 0
    %453 = vmatpush1.bf16.xpose.msra.mxu0 %v450
    %454 = vmatprep.subr.bf16.mxu0 0
    %455 = vmatpush1.bf16.xpose.msra.mxu0 0
    %456 = vmatprep.subr.bf16.mxu0 0
    %457 = vmatpush1.bf16.xpose.msra.mxu0 0
    %458 = vmatprep.subr.bf16.mxu0 0
    %459 = vmatpush1.bf16.xpose.msra.mxu0 0
    %460 = vmatprep.subr.bf16.mxu0 0
    %461 = vmatpush1.bf16.xpose.msra.mxu0 0
    %462 = vmatprep.subr.bf16.mxu0 0
    %463 = vmatpush1.bf16.xpose.msra.mxu0 0
    %464 = vmatprep.subr.bf16.mxu0 0
    %465 = vmatpush1.bf16.xpose.msra.mxu0 0
    %466 = vmatprep.subr.bf16.mxu0 0
    %467 = vmatpush1.bf16.xpose.msra.mxu0 0
    %468 = vmatprep.subr.bf16.mxu0 0
    %469 = vmatpush1.bf16.xpose.msra.mxu0 0
    %470 = vmatprep.subr.bf16.mxu0 0
    %471 = vmatpush1.bf16.xpose.msra.mxu0 0
    %472 = vmatprep.subr.bf16.mxu0 0
    %473 = vmatpush1.bf16.xpose.msra.mxu0 0
    %474 = vmatprep.subr.bf16.mxu0 0
    %475 = vmatpush1.bf16.xpose.msra.mxu0 0
    %476 = vmatprep.subr.bf16.mxu0 0
    %477 = vmatpush1.bf16.xpose.msra.mxu0 0
    %478 = vmatprep.subr.bf16.mxu0 0
    %479 = vmatpush1.bf16.xpose.msra.mxu0 0
    %480 = vmatprep.subr.bf16.mxu0 0
    %481 = vmatpush1.bf16.xpose.msra.mxu0 0
    %482 = vmatprep.subr.bf16.mxu0 0
    %483 = vmatpush1.bf16.xpose.msra.mxu0 0
    %484 = vmatprep.mubr.bf16.mxu0 0
    %485 = vmatmul.mubr.bf16.gmra.mrb[0].mxu0 %v447
    %v486 = vpop.f32.mrb[0].mxu0
    %v487 = vadd.f32 %v217, %v486
    %v488 = vpop.f32.mrb[0].mxu0
    %v489 = vpop.f32.mrb[0].mxu0
    %v490 = vpop.f32.mrb[0].mxu0
    %491 = vdwg.mxu0
    %v492 = vsel %vm267, %v487, -inf
    %493 = vmax.xlane.f32.xlu0 %v492
    %v494 = vpop.xlane.xlu0 %493
    %v495 = vsub.f32 %v487, %v494
    %v496 = vmul.f32 %v495, 1.442695
    %v497 = vpow.pop %v496
    %v498 = vsel %vm267, %v497, 0.0
    %499 = vadd.xlane.f32.xlu0 %v498
    %v500 = vpop.xlane.xlu0 %499
    %v501 = vrcp.pop %v500
    %v502 = vmul.f32 %v497, %v501
    %v503 = vpack.c.bf16 %v502, %v502
    %504 = vrot.lane.b32.xlu0 %v220, 64
    %v505 = vpop.permute.xlu0 %504
    %v507 = vsel %vm267, %v503, 0
    %v510 = vsel %vm283, %v505, 0
    %512 = vmatprep.subr.bf16.mxu0 0
    %513 = vmatpush1.bf16.msra.mxu0 %v510
    %514 = vmatprep.subr.bf16.mxu0 0
    %515 = vmatpush1.bf16.msra.mxu0 0
    %516 = vmatprep.subr.bf16.mxu0 0
    %517 = vmatpush1.bf16.msra.mxu0 0
    %518 = vmatprep.subr.bf16.mxu0 0
    %519 = vmatpush1.bf16.msra.mxu0 0
    %520 = vmatprep.subr.bf16.mxu0 0
    %521 = vmatpush1.bf16.msra.mxu0 0
    %522 = vmatprep.subr.bf16.mxu0 0
    %523 = vmatpush1.bf16.msra.mxu0 0
    %524 = vmatprep.subr.bf16.mxu0 0
    %525 = vmatpush1.bf16.msra.mxu0 0
    %526 = vmatprep.subr.bf16.mxu0 0
    %527 = vmatpush1.bf16.msra.mxu0 0
    %528 = vmatprep.subr.bf16.mxu0 0
    %529 = vmatpush1.bf16.msra.mxu0 0
    %530 = vmatprep.subr.bf16.mxu0 0
    %531 = vmatpush1.bf16.msra.mxu0 0
    %532 = vmatprep.subr.bf16.mxu0 0
    %533 = vmatpush1.bf16.msra.mxu0 0
    %534 = vmatprep.subr.bf16.mxu0 0
    %535 = vmatpush1.bf16.msra.mxu0 0
    %536 = vmatprep.subr.bf16.mxu0 0
    %537 = vmatpush1.bf16.msra.mxu0 0
    %538 = vmatprep.subr.bf16.mxu0 0
    %539 = vmatpush1.bf16.msra.mxu0 0
    %540 = vmatprep.subr.bf16.mxu0 0
    %541 = vmatpush1.bf16.msra.mxu0 0
    %542 = vmatprep.subr.bf16.mxu0 0
    %543 = vmatpush1.bf16.msra.mxu0 0
    %544 = vmatprep.mubr.bf16.mxu0 0
    %545 = vmatmul.mubr.bf16.gmra.mrb[0].mxu0 %v507
    %v546 = vpop.f32.mrb[0].mxu0
    %v547 = vadd.f32 0.0, %v546
    %v548 = vpop.f32.mrb[0].mxu0
    %v549 = vpop.f32.mrb[0].mxu0
    %v550 = vpop.f32.mrb[0].mxu0
    %551 = vdwg.mxu0
    %v552 = vpack.c.bf16 %v547, %v547
    %553 = vrot.lane.b32.xlu0 %v218, 32
    %v554 = vpop.permute.xlu0 %553
    %555 = vrot.lane.b32.xlu0 %v219, 32
    %v556 = vpop.permute.xlu0 %555
    %v558 = vsel %vm124, %v554, 0
    %v561 = vsel %vm124, %v556, 0
    %563 = vmatprep.subr.bf16.mxu0 0
    %564 = vmatpush1.bf16.xpose.msra.mxu0 %v561
    %565 = vmatprep.subr.bf16.mxu0 0
    %566 = vmatpush1.bf16.xpose.msra.mxu0 0
    %567 = vmatprep.subr.bf16.mxu0 0
    %568 = vmatpush1.bf16.xpose.msra.mxu0 0
    %569 = vmatprep.subr.bf16.mxu0 0
    %570 = vmatpush1.bf16.xpose.msra.mxu0 0
    %571 = vmatprep.subr.bf16.mxu0 0
    %572 = vmatpush1.bf16.xpose.msra.mxu0 0
    %573 = vmatprep.subr.bf16.mxu0 0
    %574 = vmatpush1.bf16.xpose.msra.mxu0 0
    %575 = vmatprep.subr.bf16.mxu0 0
    %576 = vmatpush1.bf16.xpose.msra.mxu0 0
    %577 = vmatprep.subr.bf16.mxu0 0
    %578 = vmatpush1.bf16.xpose.msra.mxu0 0
    %579 = vmatprep.subr.bf16.mxu0 0
    %580 = vmatpush1.bf16.xpose.msra.mxu0 0
    %581 = vmatprep.subr.bf16.mxu0 0
    %582 = vmatpush1.bf16.xpose.msra.mxu0 0
    %583 = vmatprep.subr.bf16.mxu0 0
    %584 = vmatpush1.bf16.xpose.msra.mxu0 0
    %585 = vmatprep.subr.bf16.mxu0 0
    %586 = vmatpush1.bf16.xpose.msra.mxu0 0
    %587 = vmatprep.subr.bf16.mxu0 0
    %588 = vmatpush1.bf16.xpose.msra.mxu0 0
    %589 = vmatprep.subr.bf16.mxu0 0
    %590 = vmatpush1.bf16.xpose.msra.mxu0 0
    %591 = vmatprep.subr.bf16.mxu0 0
    %592 = vmatpush1.bf16.xpose.msra.mxu0 0
    %593 = vmatprep.subr.bf16.mxu0 0
    %594 = vmatpush1.bf16.xpose.msra.mxu0 0
    %595 = vmatprep.mubr.bf16.mxu0 0
    %596 = vmatmul.mubr.bf16.gmra.mrb[0].mxu0 %v558
    %v597 = vpop.f32.mrb[0].mxu0
    %v598 = vadd.f32 %v217, %v597
    %v599 = vpop.f32.mrb[0].mxu0
    %v600 = vpop.f32.mrb[0].mxu0
    %v601 = vpop.f32.mrb[0].mxu0
    %602 = vdwg.mxu0
    %v603 = vsel %vm267, %v598, -inf
    %604 = vmax.xlane.f32.xlu0 %v603
    %v605 = vpop.xlane.xlu0 %604
    %v606 = vsub.f32 %v598, %v605
    %v607 = vmul.f32 %v606, 1.442695
    %v608 = vpow.pop %v607
    %v609 = vsel %vm267, %v608, 0.0
    %610 = vadd.xlane.f32.xlu0 %v609
    %v611 = vpop.xlane.xlu0 %610
    %v612 = vrcp.pop %v611
    %v613 = vmul.f32 %v608, %v612
    %v614 = vpack.c.bf16 %v613, %v613
    %615 = vrot.lane.b32.xlu0 %v220, 32
    %v616 = vpop.permute.xlu0 %615
    %v618 = vsel %vm267, %v614, 0
    %v621 = vsel %vm283, %v616, 0
    %623 = vmatprep.subr.bf16.mxu0 0
    %624 = vmatpush1.bf16.msra.mxu0 %v621
    %625 = vmatprep.subr.bf16.mxu0 0
    %626 = vmatpush1.bf16.msra.mxu0 0
    %627 = vmatprep.subr.bf16.mxu0 0
    %628 = vmatpush1.bf16.msra.mxu0 0
    %629 = vmatprep.subr.bf16.mxu0 0
    %630 = vmatpush1.bf16.msra.mxu0 0
    %631 = vmatprep.subr.bf16.mxu0 0
    %632 = vmatpush1.bf16.msra.mxu0 0
    %633 = vmatprep.subr.bf16.mxu0 0
    %634 = vmatpush1.bf16.msra.mxu0 0
    %635 = vmatprep.subr.bf16.mxu0 0
    %636 = vmatpush1.bf16.msra.mxu0 0
    %637 = vmatprep.subr.bf16.mxu0 0
    %638 = vmatpush1.bf16.msra.mxu0 0
    %639 = vmatprep.subr.bf16.mxu0 0
    %640 = vmatpush1.bf16.msra.mxu0 0
    %641 = vmatprep.subr.bf16.mxu0 0
    %642 = vmatpush1.bf16.msra.mxu0 0
    %643 = vmatprep.subr.bf16.mxu0 0
    %644 = vmatpush1.bf16.msra.mxu0 0
    %645 = vmatprep.subr.bf16.mxu0 0
    %646 = vmatpush1.bf16.msra.mxu0 0
    %647 = vmatprep.subr.bf16.mxu0 0
    %648 = vmatpush1.bf16.msra.mxu0 0
    %649 = vmatprep.subr.bf16.mxu0 0
    %650 = vmatpush1.bf16.msra.mxu0 0
    %651 = vmatprep.subr.bf16.mxu0 0
    %652 = vmatpush1.bf16.msra.mxu0 0
    %653 = vmatprep.subr.bf16.mxu0 0
    %654 = vmatpush1.bf16.msra.mxu0 0
    %655 = vmatprep.mubr.bf16.mxu0 0
    %656 = vmatmul.mubr.bf16.gmra.mrb[0].mxu0 %v618
    %v657 = vpop.f32.mrb[0].mxu0
    %v658 = vadd.f32 0.0, %v657
    %v659 = vpop.f32.mrb[0].mxu0
    %v660 = vpop.f32.mrb[0].mxu0
    %v661 = vpop.f32.mrb[0].mxu0
    %662 = vdwg.mxu0
    %v663 = vpack.c.bf16 %v658, %v658
    %665 = vrot.lane.b32.xlu0 %v441, 32
    %v666 = vpop.permute.xlu0 %665
    %668 = vrot.lane.b32.xlu0 %v552, 64
    %v669 = vpop.permute.xlu0 %668
    %671 = vrot.lane.b32.xlu0 %v663, 96
    %v672 = vpop.permute.xlu0 %671
    %v675 = vsel %vm124, %v327, %v666
    %vm676 = vcmask 523264
    %v678 = vsel %vm676, %v675, %v669
    %vm679 = vcmask 785408
    %v681 = vsel %vm679, %v678, %v672
    %v684 = vlaneseq
    %v685 = vshrl.u32 %v684, 7
    %v686 = vsub.s32 0, %v685
    %v687 = vrot.slane %v86, %v686
    %v705 = vunpack.c.l.b16 %v70
    %v706 = vunpack.c.l.b16 %v71
    %v707 = vunpack.c.l.b16 %v72
    %v708 = vunpack.c.l.b16 %v73
    %v709 = vunpack.c.l.b16 %v74
    %v710 = vunpack.c.l.b16 %v75
    %v711 = vunpack.c.l.b16 %v76
    %v712 = vunpack.c.l.b16 %v77
    %v713 = vunpack.c.l.b16 %v78
    %v714 = vunpack.c.l.b16 %v79
    %v715 = vunpack.c.l.b16 %v80
    %v716 = vunpack.c.l.b16 %v81
    %v717 = vunpack.c.l.b16 %v82
    %v718 = vunpack.c.l.b16 %v83
    %v719 = vunpack.c.l.b16 %v84
    %v720 = vunpack.c.l.b16 %v85
    %v721 = vpack.c.b16 %v706, %v705
    %v722 = vpack.c.b16 %v708, %v707
    %v723 = vpack.c.b16 %v710, %v709
    %v724 = vpack.c.b16 %v712, %v711
    %v725 = vpack.c.b16 %v714, %v713
    %v726 = vpack.c.b16 %v716, %v715
    %v727 = vpack.c.b16 %v718, %v717
    %v728 = vpack.c.b16 %v720, %v719
    %737 = vmatprep.subr.bf16.mxu0 0
    %738 = vmatpush1.bf16.msra.mxu0 %v721
    %739 = vmatprep.subr.bf16.mxu0 0
    %740 = vmatpush1.bf16.msra.mxu0 %v722
    %741 = vmatprep.subr.bf16.mxu0 0
    %742 = vmatpush1.bf16.msra.mxu0 %v723
    %743 = vmatprep.subr.bf16.mxu0 0
    %744 = vmatpush1.bf16.msra.mxu0 %v724
    %745 = vmatprep.subr.bf16.mxu0 0
    %746 = vmatpush1.bf16.msra.mxu0 %v725
    %747 = vmatprep.subr.bf16.mxu0 0
    %748 = vmatpush1.bf16.msra.mxu0 %v726
    %749 = vmatprep.subr.bf16.mxu0 0
    %750 = vmatpush1.bf16.msra.mxu0 %v727
    %751 = vmatprep.subr.bf16.mxu0 0
    %752 = vmatpush1.bf16.msra.mxu0 %v728
    %753 = vmatprep.subr.bf16.mxu0 0
    %754 = vmatpush1.bf16.msra.mxu0 0
    %755 = vmatprep.subr.bf16.mxu0 0
    %756 = vmatpush1.bf16.msra.mxu0 0
    %757 = vmatprep.subr.bf16.mxu0 0
    %758 = vmatpush1.bf16.msra.mxu0 0
    %759 = vmatprep.subr.bf16.mxu0 0
    %760 = vmatpush1.bf16.msra.mxu0 0
    %761 = vmatprep.subr.bf16.mxu0 0
    %762 = vmatpush1.bf16.msra.mxu0 0
    %763 = vmatprep.subr.bf16.mxu0 0
    %764 = vmatpush1.bf16.msra.mxu0 0
    %765 = vmatprep.subr.bf16.mxu0 0
    %766 = vmatpush1.bf16.msra.mxu0 0
    %767 = vmatprep.subr.bf16.mxu0 0
    %768 = vmatpush1.bf16.msra.mxu0 0
    %769 = vmatprep.mubr.bf16.mxu0 0
    %770 = vmatmul.mubr.bf16.gmra.mrb[0].mxu0 %v681
    %v771 = vpop.f32.mrb[0].mxu0
    %v772 = vadd.f32 %v687, %v771
    %v773 = vpop.f32.mrb[0].mxu0
    %v774 = vpop.f32.mrb[0].mxu0
    %v775 = vpop.f32.mrb[0].mxu0
    %776 = vdwg.mxu0
    %777 = vst [vmem:[#allocation8] sm:$0xff] %v772
    %v778 = vpack.c.bf16 %v167, %v167
    %v779 = vpack.c.bf16 %v169, %v169
    %v780 = vpack.c.bf16 %v209, %v209
    %v782 = vsel %vm124, %v778, 0
    %v785 = vsel %vm124, %v779, 0
    %787 = vmatprep.subr.bf16.mxu0 0
    %788 = vmatpush1.bf16.xpose.msra.mxu0 %v785
    %789 = vmatprep.subr.bf16.mxu0 0
    %790 = vmatpush1.bf16.xpose.msra.mxu0 0
    %791 = vmatprep.subr.bf16.mxu0 0
    %792 = vmatpush1.bf16.xpose.msra.mxu0 0
    %793 = vmatprep.subr.bf16.mxu0 0
    %794 = vmatpush1.bf16.xpose.msra.mxu0 0
    %795 = vmatprep.subr.bf16.mxu0 0
    %796 = vmatpush1.bf16.xpose.msra.mxu0 0
    %797 = vmatprep.subr.bf16.mxu0 0
    %798 = vmatpush1.bf16.xpose.msra.mxu0 0
    %799 = vmatprep.subr.bf16.mxu0 0
    %800 = vmatpush1.bf16.xpose.msra.mxu0 0
    %801 = vmatprep.subr.bf16.mxu0 0
    %802 = vmatpush1.bf16.xpose.msra.mxu0 0
    %803 = vmatprep.subr.bf16.mxu0 0
    %804 = vmatpush1.bf16.xpose.msra.mxu0 0
    %805 = vmatprep.subr.bf16.mxu0 0
    %806 = vmatpush1.bf16.xpose.msra.mxu0 0
    %807 = vmatprep.subr.bf16.mxu0 0
    %808 = vmatpush1.bf16.xpose.msra.mxu0 0
    %809 = vmatprep.subr.bf16.mxu0 0
    %810 = vmatpush1.bf16.xpose.msra.mxu0 0
    %811 = vmatprep.subr.bf16.mxu0 0
    %812 = vmatpush1.bf16.xpose.msra.mxu0 0
    %813 = vmatprep.subr.bf16.mxu0 0
    %814 = vmatpush1.bf16.xpose.msra.mxu0 0
    %815 = vmatprep.subr.bf16.mxu0 0
    %816 = vmatpush1.bf16.xpose.msra.mxu0 0
    %817 = vmatprep.subr.bf16.mxu0 0
    %818 = vmatpush1.bf16.xpose.msra.mxu0 0
    %819 = vmatprep.mubr.bf16.mxu0 0
    %820 = vmatmul.mubr.bf16.gmra.mrb[0].mxu0 %v782
    %v821 = vpop.f32.mrb[0].mxu0
    %v822 = vadd.f32 %v217, %v821
    %v823 = vpop.f32.mrb[0].mxu0
    %v824 = vpop.f32.mrb[0].mxu0
    %v825 = vpop.f32.mrb[0].mxu0
    %826 = vdwg.mxu0
    %v827 = vsel %vm267, %v822, -inf
    %828 = vmax.xlane.f32.xlu0 %v827
    %v829 = vpop.xlane.xlu0 %828
    %v830 = vsub.f32 %v822, %v829
    %v831 = vmul.f32 %v830, 1.442695
    %v832 = vpow.pop %v831
    %v833 = vsel %vm267, %v832, 0.0
    %834 = vadd.xlane.f32.xlu0 %v833
    %v835 = vpop.xlane.xlu0 %834
    %v836 = vrcp.pop %v835
    %v837 = vmul.f32 %v832, %v836
    %v838 = vpack.c.bf16 %v837, %v837
    %v840 = vsel %vm267, %v838, 0
    %v843 = vsel %vm283, %v780, 0
    %845 = vmatprep.subr.bf16.mxu0 0
    %846 = vmatpush1.bf16.msra.mxu0 %v843
    %847 = vmatprep.subr.bf16.mxu0 0
    %848 = vmatpush1.bf16.msra.mxu0 0
    %849 = vmatprep.subr.bf16.mxu0 0
    %850 = vmatpush1.bf16.msra.mxu0 0
    %851 = vmatprep.subr.bf16.mxu0 0
    %852 = vmatpush1.bf16.msra.mxu0 0
    %853 = vmatprep.subr.bf16.mxu0 0
    %854 = vmatpush1.bf16.msra.mxu0 0
    %855 = vmatprep.subr.bf16.mxu0 0
    %856 = vmatpush1.bf16.msra.mxu0 0
    %857 = vmatprep.subr.bf16.mxu0 0
    %858 = vmatpush1.bf16.msra.mxu0 0
    %859 = vmatprep.subr.bf16.mxu0 0
    %860 = vmatpush1.bf16.msra.mxu0 0
    %861 = vmatprep.subr.bf16.mxu0 0
    %862 = vmatpush1.bf16.msra.mxu0 0
    %863 = vmatprep.subr.bf16.mxu0 0
    %864 = vmatpush1.bf16.msra.mxu0 0
    %865 = vmatprep.subr.bf16.mxu0 0
    %866 = vmatpush1.bf16.msra.mxu0 0
    %867 = vmatprep.subr.bf16.mxu0 0
    %868 = vmatpush1.bf16.msra.mxu0 0
    %869 = vmatprep.subr.bf16.mxu0 0
    %870 = vmatpush1.bf16.msra.mxu0 0
    %871 = vmatprep.subr.bf16.mxu0 0
    %872 = vmatpush1.bf16.msra.mxu0 0
    %873 = vmatprep.subr.bf16.mxu0 0
    %874 = vmatpush1.bf16.msra.mxu0 0
    %875 = vmatprep.subr.bf16.mxu0 0
    %876 = vmatpush1.bf16.msra.mxu0 0
    %877 = vmatprep.mubr.bf16.mxu0 0
    %878 = vmatmul.mubr.bf16.gmra.mrb[0].mxu0 %v840
    %v879 = vpop.f32.mrb[0].mxu0
    %v880 = vadd.f32 0.0, %v879
    %v881 = vpop.f32.mrb[0].mxu0
    %v882 = vpop.f32.mrb[0].mxu0
    %v883 = vpop.f32.mrb[0].mxu0
    %884 = vdwg.mxu0
    %v885 = vpack.c.bf16 %v880, %v880
    %887 = vrot.lane.b32.xlu0 %v778, 96
    %v888 = vpop.permute.xlu0 %887
    %890 = vrot.lane.b32.xlu0 %v779, 96
    %v891 = vpop.permute.xlu0 %890
    %v893 = vsel %vm124, %v888, 0
    %v896 = vsel %vm124, %v891, 0
    %898 = vmatprep.subr.bf16.mxu0 0
    %899 = vmatpush1.bf16.xpose.msra.mxu0 %v896
    %900 = vmatprep.subr.bf16.mxu0 0
    %901 = vmatpush1.bf16.xpose.msra.mxu0 0
    %902 = vmatprep.subr.bf16.mxu0 0
    %903 = vmatpush1.bf16.xpose.msra.mxu0 0
    %904 = vmatprep.subr.bf16.mxu0 0
    %905 = vmatpush1.bf16.xpose.msra.mxu0 0
    %906 = vmatprep.subr.bf16.mxu0 0
    %907 = vmatpush1.bf16.xpose.msra.mxu0 0
    %908 = vmatprep.subr.bf16.mxu0 0
    %909 = vmatpush1.bf16.xpose.msra.mxu0 0
    %910 = vmatprep.subr.bf16.mxu0 0
    %911 = vmatpush1.bf16.xpose.msra.mxu0 0
    %912 = vmatprep.subr.bf16.mxu0 0
    %913 = vmatpush1.bf16.xpose.msra.mxu0 0
    %914 = vmatprep.subr.bf16.mxu0 0
    %915 = vmatpush1.bf16.xpose.msra.mxu0 0
    %916 = vmatprep.subr.bf16.mxu0 0
    %917 = vmatpush1.bf16.xpose.msra.mxu0 0
    %918 = vmatprep.subr.bf16.mxu0 0
    %919 = vmatpush1.bf16.xpose.msra.mxu0 0
    %920 = vmatprep.subr.bf16.mxu0 0
    %921 = vmatpush1.bf16.xpose.msra.mxu0 0
    %922 = vmatprep.subr.bf16.mxu0 0
    %923 = vmatpush1.bf16.xpose.msra.mxu0 0
    %924 = vmatprep.subr.bf16.mxu0 0
    %925 = vmatpush1.bf16.xpose.msra.mxu0 0
    %926 = vmatprep.subr.bf16.mxu0 0
    %927 = vmatpush1.bf16.xpose.msra.mxu0 0
    %928 = vmatprep.subr.bf16.mxu0 0
    %929 = vmatpush1.bf16.xpose.msra.mxu0 0
    %930 = vmatprep.mubr.bf16.mxu0 0
    %931 = vmatmul.mubr.bf16.gmra.mrb[0].mxu0 %v893
    %v932 = vpop.f32.mrb[0].mxu0
    %v933 = vadd.f32 %v217, %v932
    %v934 = vpop.f32.mrb[0].mxu0
    %v935 = vpop.f32.mrb[0].mxu0
    %v936 = vpop.f32.mrb[0].mxu0
    %937 = vdwg.mxu0
    %v938 = vsel %vm267, %v933, -inf
    %939 = vmax.xlane.f32.xlu0 %v938
    %v940 = vpop.xlane.xlu0 %939
    %v941 = vsub.f32 %v933, %v940
    %v942 = vmul.f32 %v941, 1.442695
    %v943 = vpow.pop %v942
    %v944 = vsel %vm267, %v943, 0.0
    %945 = vadd.xlane.f32.xlu0 %v944
    %v946 = vpop.xlane.xlu0 %945
    %v947 = vrcp.pop %v946
    %v948 = vmul.f32 %v943, %v947
    %v949 = vpack.c.bf16 %v948, %v948
    %951 = vrot.lane.b32.xlu0 %v780, 96
    %v952 = vpop.permute.xlu0 %951
    %v954 = vsel %vm267, %v949, 0
    %v957 = vsel %vm283, %v952, 0
    %959 = vmatprep.subr.bf16.mxu0 0
    %960 = vmatpush1.bf16.msra.mxu0 %v957
    %961 = vmatprep.subr.bf16.mxu0 0
    %962 = vmatpush1.bf16.msra.mxu0 0
    %963 = vmatprep.subr.bf16.mxu0 0
    %964 = vmatpush1.bf16.msra.mxu0 0
    %965 = vmatprep.subr.bf16.mxu0 0
    %966 = vmatpush1.bf16.msra.mxu0 0
    %967 = vmatprep.subr.bf16.mxu0 0
    %968 = vmatpush1.bf16.msra.mxu0 0
    %969 = vmatprep.subr.bf16.mxu0 0
    %970 = vmatpush1.bf16.msra.mxu0 0
    %971 = vmatprep.subr.bf16.mxu0 0
    %972 = vmatpush1.bf16.msra.mxu0 0
    %973 = vmatprep.subr.bf16.mxu0 0
    %974 = vmatpush1.bf16.msra.mxu0 0
    %975 = vmatprep.subr.bf16.mxu0 0
    %976 = vmatpush1.bf16.msra.mxu0 0
    %977 = vmatprep.subr.bf16.mxu0 0
    %978 = vmatpush1.bf16.msra.mxu0 0
    %979 = vmatprep.subr.bf16.mxu0 0
    %980 = vmatpush1.bf16.msra.mxu0 0
    %981 = vmatprep.subr.bf16.mxu0 0
    %982 = vmatpush1.bf16.msra.mxu0 0
    %983 = vmatprep.subr.bf16.mxu0 0
    %984 = vmatpush1.bf16.msra.mxu0 0
    %985 = vmatprep.subr.bf16.mxu0 0
    %986 = vmatpush1.bf16.msra.mxu0 0
    %987 = vmatprep.subr.bf16.mxu0 0
    %988 = vmatpush1.bf16.msra.mxu0 0
    %989 = vmatprep.subr.bf16.mxu0 0
    %990 = vmatpush1.bf16.msra.mxu0 0
    %991 = vmatprep.mubr.bf16.mxu0 0
    %992 = vmatmul.mubr.bf16.gmra.mrb[0].mxu0 %v954
    %v993 = vpop.f32.mrb[0].mxu0
    %v994 = vadd.f32 0.0, %v993
    %v995 = vpop.f32.mrb[0].mxu0
    %v996 = vpop.f32.mrb[0].mxu0
    %v997 = vpop.f32.mrb[0].mxu0
    %998 = vdwg.mxu0
    %v999 = vpack.c.bf16 %v994, %v994
    %1000 = vrot.lane.b32.xlu0 %v778, 64
    %v1001 = vpop.permute.xlu0 %1000
    %1002 = vrot.lane.b32.xlu0 %v779, 64
    %v1003 = vpop.permute.xlu0 %1002
    %v1005 = vsel %vm124, %v1001, 0
    %v1008 = vsel %vm124, %v1003, 0
    %1010 = vmatprep.subr.bf16.mxu0 0
    %1011 = vmatpush1.bf16.xpose.msra.mxu0 %v1008
    %1012 = vmatprep.subr.bf16.mxu0 0
    %1013 = vmatpush1.bf16.xpose.msra.mxu0 0
    %1014 = vmatprep.subr.bf16.mxu0 0
    %1015 = vmatpush1.bf16.xpose.msra.mxu0 0
    %1016 = vmatprep.subr.bf16.mxu0 0
    %1017 = vmatpush1.bf16.xpose.msra.mxu0 0
    %1018 = vmatprep.subr.bf16.mxu0 0
    %1019 = vmatpush1.bf16.xpose.msra.mxu0 0
    %1020 = vmatprep.subr.bf16.mxu0 0
    %1021 = vmatpush1.bf16.xpose.msra.mxu0 0
    %1022 = vmatprep.subr.bf16.mxu0 0
    %1023 = vmatpush1.bf16.xpose.msra.mxu0 0
    %1024 = vmatprep.subr.bf16.mxu0 0
    %1025 = vmatpush1.bf16.xpose.msra.mxu0 0
    %1026 = vmatprep.subr.bf16.mxu0 0
    %1027 = vmatpush1.bf16.xpose.msra.mxu0 0
    %1028 = vmatprep.subr.bf16.mxu0 0
    %1029 = vmatpush1.bf16.xpose.msra.mxu0 0
    %1030 = vmatprep.subr.bf16.mxu0 0
    %1031 = vmatpush1.bf16.xpose.msra.mxu0 0
    %1032 = vmatprep.subr.bf16.mxu0 0
    %1033 = vmatpush1.bf16.xpose.msra.mxu0 0
    %1034 = vmatprep.subr.bf16.mxu0 0
    %1035 = vmatpush1.bf16.xpose.msra.mxu0 0
    %1036 = vmatprep.subr.bf16.mxu0 0
    %1037 = vmatpush1.bf16.xpose.msra.mxu0 0
    %1038 = vmatprep.subr.bf16.mxu0 0
    %1039 = vmatpush1.bf16.xpose.msra.mxu0 0
    %1040 = vmatprep.subr.bf16.mxu0 0
    %1041 = vmatpush1.bf16.xpose.msra.mxu0 0
    %1042 = vmatprep.mubr.bf16.mxu0 0
    %1043 = vmatmul.mubr.bf16.gmra.mrb[0].mxu0 %v1005
    %v1044 = vpop.f32.mrb[0].mxu0
    %v1045 = vadd.f32 %v217, %v1044
    %v1046 = vpop.f32.mrb[0].mxu0
    %v1047 = vpop.f32.mrb[0].mxu0
    %v1048 = vpop.f32.mrb[0].mxu0
    %1049 = vdwg.mxu0
    %v1050 = vsel %vm267, %v1045, -inf
    %1051 = vmax.xlane.f32.xlu0 %v1050
    %v1052 = vpop.xlane.xlu0 %1051
    %v1053 = vsub.f32 %v1045, %v1052
    %v1054 = vmul.f32 %v1053, 1.442695
    %v1055 = vpow.pop %v1054
    %v1056 = vsel %vm267, %v1055, 0.0
    %1057 = vadd.xlane.f32.xlu0 %v1056
    %v1058 = vpop.xlane.xlu0 %1057
    %v1059 = vrcp.pop %v1058
    %v1060 = vmul.f32 %v1055, %v1059
    %v1061 = vpack.c.bf16 %v1060, %v1060
    %1062 = vrot.lane.b32.xlu0 %v780, 64
    %v1063 = vpop.permute.xlu0 %1062
    %v1065 = vsel %vm267, %v1061, 0
    %v1068 = vsel %vm283, %v1063, 0
    %1070 = vmatprep.subr.bf16.mxu0 0
    %1071 = vmatpush1.bf16.msra.mxu0 %v1068
    %1072 = vmatprep.subr.bf16.mxu0 0
    %1073 = vmatpush1.bf16.msra.mxu0 0
    %1074 = vmatprep.subr.bf16.mxu0 0
    %1075 = vmatpush1.bf16.msra.mxu0 0
    %1076 = vmatprep.subr.bf16.mxu0 0
    %1077 = vmatpush1.bf16.msra.mxu0 0
    %1078 = vmatprep.subr.bf16.mxu0 0
    %1079 = vmatpush1.bf16.msra.mxu0 0
    %1080 = vmatprep.subr.bf16.mxu0 0
    %1081 = vmatpush1.bf16.msra.mxu0 0
    %1082 = vmatprep.subr.bf16.mxu0 0
    %1083 = vmatpush1.bf16.msra.mxu0 0
    %1084 = vmatprep.subr.bf16.mxu0 0
    %1085 = vmatpush1.bf16.msra.mxu0 0
    %1086 = vmatprep.subr.bf16.mxu0 0
    %1087 = vmatpush1.bf16.msra.mxu0 0
    %1088 = vmatprep.subr.bf16.mxu0 0
    %1089 = vmatpush1.bf16.msra.mxu0 0
    %1090 = vmatprep.subr.bf16.mxu0 0
    %1091 = vmatpush1.bf16.msra.mxu0 0
    %1092 = vmatprep.subr.bf16.mxu0 0
    %1093 = vmatpush1.bf16.msra.mxu0 0
    %1094 = vmatprep.subr.bf16.mxu0 0
    %1095 = vmatpush1.bf16.msra.mxu0 0
    %1096 = vmatprep.subr.bf16.mxu0 0
    %1097 = vmatpush1.bf16.msra.mxu0 0
    %1098 = vmatprep.subr.bf16.mxu0 0
    %1099 = vmatpush1.bf16.msra.mxu0 0
    %1100 = vmatprep.subr.bf16.mxu0 0
    %1101 = vmatpush1.bf16.msra.mxu0 0
    %1102 = vmatprep.mubr.bf16.mxu0 0
    %1103 = vmatmul.mubr.bf16.gmra.mrb[0].mxu0 %v1065
    %v1104 = vpop.f32.mrb[0].mxu0
    %v1105 = vadd.f32 0.0, %v1104
    %v1106 = vpop.f32.mrb[0].mxu0
    %v1107 = vpop.f32.mrb[0].mxu0
    %v1108 = vpop.f32.mrb[0].mxu0
    %1109 = vdwg.mxu0
    %v1110 = vpack.c.bf16 %v1105, %v1105
    %1111 = vrot.lane.b32.xlu0 %v778, 32
    %v1112 = vpop.permute.xlu0 %1111
    %1113 = vrot.lane.b32.xlu0 %v779, 32
    %v1114 = vpop.permute.xlu0 %1113
    %v1116 = vsel %vm124, %v1112, 0
    %v1119 = vsel %vm124, %v1114, 0
    %1121 = vmatprep.subr.bf16.mxu0 0
    %1122 = vmatpush1.bf16.xpose.msra.mxu0 %v1119
    %1123 = vmatprep.subr.bf16.mxu0 0
    %1124 = vmatpush1.bf16.xpose.msra.mxu0 0
    %1125 = vmatprep.subr.bf16.mxu0 0
    %1126 = vmatpush1.bf16.xpose.msra.mxu0 0
    %1127 = vmatprep.subr.bf16.mxu0 0
    %1128 = vmatpush1.bf16.xpose.msra.mxu0 0
    %1129 = vmatprep.subr.bf16.mxu0 0
    %1130 = vmatpush1.bf16.xpose.msra.mxu0 0
    %1131 = vmatprep.subr.bf16.mxu0 0
    %1132 = vmatpush1.bf16.xpose.msra.mxu0 0
    %1133 = vmatprep.subr.bf16.mxu0 0
    %1134 = vmatpush1.bf16.xpose.msra.mxu0 0
    %1135 = vmatprep.subr.bf16.mxu0 0
    %1136 = vmatpush1.bf16.xpose.msra.mxu0 0
    %1137 = vmatprep.subr.bf16.mxu0 0
    %1138 = vmatpush1.bf16.xpose.msra.mxu0 0
    %1139 = vmatprep.subr.bf16.mxu0 0
    %1140 = vmatpush1.bf16.xpose.msra.mxu0 0
    %1141 = vmatprep.subr.bf16.mxu0 0
    %1142 = vmatpush1.bf16.xpose.msra.mxu0 0
    %1143 = vmatprep.subr.bf16.mxu0 0
    %1144 = vmatpush1.bf16.xpose.msra.mxu0 0
    %1145 = vmatprep.subr.bf16.mxu0 0
    %1146 = vmatpush1.bf16.xpose.msra.mxu0 0
    %1147 = vmatprep.subr.bf16.mxu0 0
    %1148 = vmatpush1.bf16.xpose.msra.mxu0 0
    %1149 = vmatprep.subr.bf16.mxu0 0
    %1150 = vmatpush1.bf16.xpose.msra.mxu0 0
    %1151 = vmatprep.subr.bf16.mxu0 0
    %1152 = vmatpush1.bf16.xpose.msra.mxu0 0
    %1153 = vmatprep.mubr.bf16.mxu0 0
    %1154 = vmatmul.mubr.bf16.gmra.mrb[0].mxu0 %v1116
    %v1155 = vpop.f32.mrb[0].mxu0
    %v1156 = vadd.f32 %v217, %v1155
    %v1157 = vpop.f32.mrb[0].mxu0
    %v1158 = vpop.f32.mrb[0].mxu0
    %v1159 = vpop.f32.mrb[0].mxu0
    %1160 = vdwg.mxu0
    %v1161 = vsel %vm267, %v1156, -inf
    %1162 = vmax.xlane.f32.xlu0 %v1161
    %v1163 = vpop.xlane.xlu0 %1162
    %v1164 = vsub.f32 %v1156, %v1163
    %v1165 = vmul.f32 %v1164, 1.442695
    %v1166 = vpow.pop %v1165
    %v1167 = vsel %vm267, %v1166, 0.0
    %1168 = vadd.xlane.f32.xlu0 %v1167
    %v1169 = vpop.xlane.xlu0 %1168
    %v1170 = vrcp.pop %v1169
    %v1171 = vmul.f32 %v1166, %v1170
    %v1172 = vpack.c.bf16 %v1171, %v1171
    %1173 = vrot.lane.b32.xlu0 %v780, 32
    %v1174 = vpop.permute.xlu0 %1173
    %v1176 = vsel %vm267, %v1172, 0
    %v1179 = vsel %vm283, %v1174, 0
    %1181 = vmatprep.subr.bf16.mxu0 0
    %1182 = vmatpush1.bf16.msra.mxu0 %v1179
    %1183 = vmatprep.subr.bf16.mxu0 0
    %1184 = vmatpush1.bf16.msra.mxu0 0
    %1185 = vmatprep.subr.bf16.mxu0 0
    %1186 = vmatpush1.bf16.msra.mxu0 0
    %1187 = vmatprep.subr.bf16.mxu0 0
    %1188 = vmatpush1.bf16.msra.mxu0 0
    %1189 = vmatprep.subr.bf16.mxu0 0
    %1190 = vmatpush1.bf16.msra.mxu0 0
    %1191 = vmatprep.subr.bf16.mxu0 0
    %1192 = vmatpush1.bf16.msra.mxu0 0
    %1193 = vmatprep.subr.bf16.mxu0 0
    %1194 = vmatpush1.bf16.msra.mxu0 0
    %1195 = vmatprep.subr.bf16.mxu0 0
    %1196 = vmatpush1.bf16.msra.mxu0 0
    %1197 = vmatprep.subr.bf16.mxu0 0
    %1198 = vmatpush1.bf16.msra.mxu0 0
    %1199 = vmatprep.subr.bf16.mxu0 0
    %1200 = vmatpush1.bf16.msra.mxu0 0
    %1201 = vmatprep.subr.bf16.mxu0 0
    %1202 = vmatpush1.bf16.msra.mxu0 0
    %1203 = vmatprep.subr.bf16.mxu0 0
    %1204 = vmatpush1.bf16.msra.mxu0 0
    %1205 = vmatprep.subr.bf16.mxu0 0
    %1206 = vmatpush1.bf16.msra.mxu0 0
    %1207 = vmatprep.subr.bf16.mxu0 0
    %1208 = vmatpush1.bf16.msra.mxu0 0
    %1209 = vmatprep.subr.bf16.mxu0 0
    %1210 = vmatpush1.bf16.msra.mxu0 0
    %1211 = vmatprep.subr.bf16.mxu0 0
    %1212 = vmatpush1.bf16.msra.mxu0 0
    %1213 = vmatprep.mubr.bf16.mxu0 0
    %1214 = vmatmul.mubr.bf16.gmra.mrb[0].mxu0 %v1176
    %v1215 = vpop.f32.mrb[0].mxu0
    %v1216 = vadd.f32 0.0, %v1215
    %v1217 = vpop.f32.mrb[0].mxu0
    %v1218 = vpop.f32.mrb[0].mxu0
    %v1219 = vpop.f32.mrb[0].mxu0
    %1220 = vdwg.mxu0
    %v1221 = vpack.c.bf16 %v1216, %v1216
    %1223 = vrot.lane.b32.xlu0 %v999, 32
    %v1224 = vpop.permute.xlu0 %1223
    %1226 = vrot.lane.b32.xlu0 %v1110, 64
    %v1227 = vpop.permute.xlu0 %1226
    %1229 = vrot.lane.b32.xlu0 %v1221, 96
    %v1230 = vpop.permute.xlu0 %1229
    %v1233 = vsel %vm124, %v885, %v1224
    %v1235 = vsel %vm676, %v1233, %v1227
    %v1237 = vsel %vm679, %v1235, %v1230
    %1239 = vmatprep.subr.bf16.mxu0 0
    %1240 = vmatpush1.bf16.msra.mxu0 %v721
    %1241 = vmatprep.subr.bf16.mxu0 0
    %1242 = vmatpush1.bf16.msra.mxu0 %v722
    %1243 = vmatprep.subr.bf16.mxu0 0
    %1244 = vmatpush1.bf16.msra.mxu0 %v723
    %1245 = vmatprep.subr.bf16.mxu0 0
    %1246 = vmatpush1.bf16.msra.mxu0 %v724
    %1247 = vmatprep.subr.bf16.mxu0 0
    %1248 = vmatpush1.bf16.msra.mxu0 %v725
    %1249 = vmatprep.subr.bf16.mxu0 0
    %1250 = vmatpush1.bf16.msra.mxu0 %v726
    %1251 = vmatprep.subr.bf16.mxu0 0
    %1252 = vmatpush1.bf16.msra.mxu0 %v727
    %1253 = vmatprep.subr.bf16.mxu0 0
    %1254 = vmatpush1.bf16.msra.mxu0 %v728
    %1255 = vmatprep.subr.bf16.mxu0 0
    %1256 = vmatpush1.bf16.msra.mxu0 0
    %1257 = vmatprep.subr.bf16.mxu0 0
    %1258 = vmatpush1.bf16.msra.mxu0 0
    %1259 = vmatprep.subr.bf16.mxu0 0
    %1260 = vmatpush1.bf16.msra.mxu0 0
    %1261 = vmatprep.subr.bf16.mxu0 0
    %1262 = vmatpush1.bf16.msra.mxu0 0
    %1263 = vmatprep.subr.bf16.mxu0 0
    %1264 = vmatpush1.bf16.msra.mxu0 0
    %1265 = vmatprep.subr.bf16.mxu0 0
    %1266 = vmatpush1.bf16.msra.mxu0 0
    %1267 = vmatprep.subr.bf16.mxu0 0
    %1268 = vmatpush1.bf16.msra.mxu0 0
    %1269 = vmatprep.subr.bf16.mxu0 0
    %1270 = vmatpush1.bf16.msra.mxu0 0
    %1271 = vmatprep.mubr.bf16.mxu0 0
    %1272 = vmatmul.mubr.bf16.gmra.mrb[0].mxu0 %v1237
    %v1273 = vpop.f32.mrb[0].mxu0
    %v1274 = vadd.f32 %v687, %v1273
    %v1275 = vpop.f32.mrb[0].mxu0
    %v1276 = vpop.f32.mrb[0].mxu0
    %v1277 = vpop.f32.mrb[0].mxu0
    %1278 = vdwg.mxu0
    %1279 = vst [vmem:[#allocation8 + $0x8] sm:$0xff] %v1274
    // Predicated region
    $region30: #{tpu_custom_call.1} parent=1 // pred_check
      _
    $region31: #{tpu_custom_call.1} parent=1 // pred_check_branch
      %1281 = sbr.rel (0) target = $region33
    $region32: #{tpu_custom_call.1} parent=1 // pred_region
      %s1283 = ssub.s32 256, 256
      %1284 = vsyncadd [#allocation4], %s1283
      %s1285 = sshll.u32 [#allocation8], 4
      %s1286 = int_to_ptr.vmem [resolvable:$true] %s1285
      %1291 = dma.vmem_to_hbm [thread:$0]  %s1286, 256, %s4, [#allocation4], 128, 128, 8
    $region33: #{tpu_custom_call.1} parent=1 // pred_fallthru
      _
    // Predicated region
    $region34: #{tpu_custom_call.1} parent=1 // pred_check
      _
    $region35: #{tpu_custom_call.1} parent=1 // pred_check_branch
      %1293 = sbr.rel (0) target = $region37
    $region36: #{tpu_custom_call.1} parent=1 // pred_region
      %1294 = dma.done [#allocation4], 256
    $region37: #{tpu_custom_call.1} parent=1 // pred_fallthru
      _
    %1295 = vsyncpa [#allocation3], 1
    %1296 = vsyncpa [#allocation6], 1
    %1297 = vsyncpa [#allocation4], 1

</llo_original>
